<compile_context>
chip_gen: v7x
topology: tpu7x:2x2x1
jax: 0.10.0
libtpu: 0.0.40
codegen_flags: <defaults>
</compile_context>

<pallas_src>
import functools

import jax
import jax.numpy as jnp
from jax.experimental import pallas as pl
from jax.experimental.pallas import tpu as pltpu


_BLUR_KERNEL_1D = {
    2: [1, 1],
    3: [1, 2, 1],
    4: [1, 3, 3, 1],
    5: [1, 4, 6, 4, 1],
    6: [1, 5, 10, 10, 5, 1],
    7: [1, 6, 15, 20, 15, 6, 1],
}

_LANE = 128


def _cdiv(a, b):
    return -(-a // b)


def _make_blur_kernel(kernel_size):
    """(k, k) normalized binomial blur kernel (matches BlurPool2d._get_blur_kernel)."""
    if kernel_size not in _BLUR_KERNEL_1D:
        raise ValueError(f"invalid blur kernel size: {kernel_size}")
    k1 = jnp.asarray(_BLUR_KERNEL_1D[kernel_size], dtype=jnp.float32).reshape(-1, 1)
    k2 = k1 @ k1.T
    return k2 / jnp.sum(k2)


def _blur1d_weights(kernel_size):
    """Normalized 1D binomial weights as Python floats (k2d[i, j] == w[i] * w[j])."""
    if kernel_size not in _BLUR_KERNEL_1D:
        raise ValueError(f"invalid blur kernel size: {kernel_size}")
    raw = [float(v) for v in _BLUR_KERNEL_1D[kernel_size]]
    tot = sum(raw)
    return tuple(v / tot for v in raw)


def _vmem_capacity_bytes():
    try:
        return int(pltpu.get_tpu_info().vmem_capacity_bytes)
    except Exception:
        return 64 * 1024 * 1024  # conservative default (v7x has 64 MiB per TensorCore)


def _blurpool_kernel(p_ref, o_ref, *, kw, stride, th_out, th_in, w_out):
    # p_ref: (s*s*th_in, Wq, GB, CS, 128) -- phase-decomposed rows with channels
    #        on the (sublane, lane) axes.  Row index = (ri*s + rj)*th_in + t.
    # o_ref: (th_out, w_out, GB, CS, 128) -- lane-dense output tile.
    s = stride
    k = len(kw)

    # Horizontal (W) pass, one running sum per needed row phase:
    #   hrows[ri][t, wo] = sum_j kw[j] * xpad[(row0 + t)*s + ri, s*wo + j]
    phases = sorted({i % s for i in range(k)})
    hrows = {}
    for ri in phases:
        acc = None
        for j in range(k):
            rj, qj = j % s, j // s
            base = (ri * s + rj) * th_in
            tap = p_ref[base:base + th_in, qj:qj + w_out, :, :, :].astype(jnp.float32)
            term = kw[j] * tap
            acc = term if acc is None else acc + term
        hrows[ri] = acc  # (th_in, w_out, GB, CS, 128) f32

    # Vertical (H) pass: out[r, wo] = sum_i kw[i] * hrows[i % s][i // s + r, wo]
    out = None
    for i in range(k):
        ri, qi = i % s, i // s
        term = kw[i] * hrows[ri][qi:qi + th_out]
        out = term if out is None else out + term
    o_ref[...] = out.astype(o_ref.dtype)
    # TODO(synk): on v6e/v7x with bf16 inputs the horizontal pass could stay in
    # bf16 (f32 only for the vertical accumulation) to halve the temporaries.


def _choose_channel_tile(bc):
    """Pick CS so the (CS, 128) channel tile minimizes padded channels; prefer larger CS."""
    best_cs, best_cp = 1, _cdiv(bc, _LANE) * _LANE
    for cs in range(1, 9):
        cp = _cdiv(bc, cs * _LANE) * cs * _LANE
        if cp < best_cp or (cp == best_cp and cs > best_cs):
            best_cs, best_cp = cs, cp
    return best_cs


def _choose_tiling(h_out, row_bytes, plane_bytes, n_groups, target_bytes):
    """Pick (th_out, n_row_tiles, groups_per_block, n_group_tiles) via cdiv tiling."""
    if plane_bytes <= target_bytes:
        gb = max(1, min(n_groups, target_bytes // max(plane_bytes, 1)))
        ng = _cdiv(n_groups, gb)
        gb = _cdiv(n_groups, ng)          # rebalance; never increases per-step bytes
        th, nh = h_out, 1
    else:
        gb, ng = 1, n_groups
        th = max(1, min(h_out, target_bytes // row_bytes))
        nh = _cdiv(h_out, th)
        th = _cdiv(h_out, nh)             # rebalance so the last tile is not tiny
    # Ensure >= 2 grid steps when the work is big enough to care, so megacore
    # sharding and input/output double buffering are not degenerate.
    if ng * nh < 2 and h_out >= 2 and gb * plane_bytes > (2 << 20):
        nh = 2
        th = _cdiv(h_out, nh)
    return th, nh, gb, ng


@functools.partial(jax.jit, static_argnames=("kernel_size", "stride", "block_bytes_target"))
def blurpool2d(x, kernel_size=3, stride=2, *, block_bytes_target=None):
    """Forward pass of BlurPool2d(kernel_size, stride) on NCHW input."""
    B, C, H, W = x.shape
    k = kernel_size
    s = stride
    pad = (k - 1) // 2
    kw = _blur1d_weights(k)

    Hp, Wp = H + 2 * pad, W + 2 * pad
    h_out = (Hp - k) // s + 1
    w_out = (Wp - k) // s + 1
    qmax = (k - 1) // s                       # halo rows needed by the vertical pass

    Wq = _cdiv(Wp, s)                         # phase-decomposed width
    BC = B * C

    # ---- channel tile: channels on (sublane, lane) = (CS, 128) -------------------
    CS = _choose_channel_tile(BC)
    CT = CS * _LANE
    G = _cdiv(BC, CT)

    # ---- per-generation block sizing / explicit VMEM accounting ------------------
    itemsize = jnp.dtype(x.dtype).itemsize
    vmem_cap = _vmem_capacity_bytes()
    if block_bytes_target is None:
        # ~8 MiB/step on v7x (64 MiB VMEM), ~14 MiB/step on v5e/v6e (128 MiB VMEM).
        block_bytes_target = (8 << 20) if vmem_cap <= (80 << 20) else (14 << 20)
    lane_slab = 8 * _LANE * itemsize          # one (<=8,128) slab as resident in VMEM
    row_bytes = s * s * Wq * lane_slab        # input bytes per output row per channel tile
    plane_bytes = row_bytes * (h_out + qmax)
    TH, NH, GB, NG = _choose_tiling(h_out, row_bytes, plane_bytes, G, block_bytes_target)
    TH_IN = TH + qmax
    Gp = NG * GB
    Cp = Gp * CT

    in_block = s * s * TH_IN * Wq * GB * lane_slab
    out_block = TH * w_out * GB * lane_slab
    n_phases = len({i % s for i in range(k)})
    temp_bytes = (n_phases * TH_IN + TH) * w_out * GB * 8 * _LANE * 4   # f32 temporaries
    est = 2 * (in_block + out_block) + temp_bytes
    budget = (vmem_cap * 3) // 4              # <= ~48 MiB on v7x, <= ~96 MiB on v5e/v6e
    vmem_limit = int(min(budget, max(32 << 20, int(1.5 * est) + (4 << 20))))
    # TODO(synk): if a single TH=1 row block still exceeds the budget (extremely wide
    # inputs), a second halo'd tiling along W would be needed.

    # ---- layout plumbing (one fused XLA pass): NCHW -> tiled channels-last -------
    # Zero padding matches F.conv2d(padding=(k-1)//2); rows/cols beyond the conv
    # padding are only read by output rows that get sliced off.
    Hq_arr = NH * TH + qmax                   # row tile hb covers rows [hb*TH, hb*TH+TH_IN)
    total_rows = Hq_arr * s
    xp = jnp.pad(x, ((0, 0), (0, 0),
                     (pad, max(0, total_rows - H - pad)),
                     (pad, Wq * s - W - pad)))
    xp = xp[:, :, :total_rows, :]
    xc = xp.reshape(BC, Hq_arr, s, Wq, s)                    # [n, a, ri, b, rj]
    xc = jnp.pad(xc, ((0, Cp - BC), (0, 0), (0, 0), (0, 0), (0, 0)))
    xc = xc.reshape(Gp, CS, _LANE, Hq_arr, s, Wq, s)         # [g, cs, cl, a, ri, b, rj]
    # Overlapping (halo'd) row windows: a -> (hb, t) with a = hb*TH + t, t < TH_IN.
    win = (jnp.arange(NH, dtype=jnp.int32)[:, None] * TH
           + jnp.arange(TH_IN, dtype=jnp.int32)[None, :])
    xw = xc[:, :, :, win]                                    # [g, cs, cl, hb, t, ri, b, rj]
    P = xw.transpose(3, 5, 7, 4, 6, 0, 1, 2)                 # [hb, ri, rj, t, b, g, cs, cl]
    P = P.reshape(NH, s * s * TH_IN, Wq, Gp, CS, _LANE)
    # TODO(synk): a channels-last caller (NHWC / (H, W, B*C)) could feed this layout
    # directly and skip both wrapper transposes, roughly halving end-to-end HBM traffic.
    # TODO(synk): when B*C << 128 most lanes are zero padding; packing a spatial factor
    # onto the lane axis (or batching more images per call) would recover that bandwidth.

    kern = functools.partial(_blurpool_kernel, kw=kw, stride=s,
                             th_out=TH, th_in=TH_IN, w_out=w_out)
    S2T = s * s * TH_IN

    out = pl.pallas_call(
        kern,
        out_shape=jax.ShapeDtypeStruct((NH, TH, w_out, Gp, CS, _LANE), x.dtype),
        grid=(NH, NG),
        in_specs=[
            pl.BlockSpec((None, S2T, Wq, GB, CS, _LANE),
                         lambda hb, g: (hb, 0, 0, g, 0, 0)),
        ],
        out_specs=pl.BlockSpec((None, TH, w_out, GB, CS, _LANE),
                               lambda hb, g: (hb, 0, 0, g, 0, 0)),
        compiler_params=pltpu.CompilerParams(
            dimension_semantics=("parallel", "parallel"),
            vmem_limit_bytes=vmem_limit,
        ),
    )(P)

    # Back to NCHW.
    out = out.reshape(NH * TH, w_out, Cp)[:h_out, :, :BC]
    return out.transpose(2, 0, 1).reshape(B, C, h_out, w_out)


def _reference(x, kernel_size, stride):
    B, C, H, W = x.shape
    pad = (kernel_size - 1) // 2
    k2d = _make_blur_kernel(kernel_size)
    y = jax.lax.conv_general_dilated(
        x.reshape(B * C, 1, H, W),
        k2d[None, None],
        window_strides=(stride, stride),
        padding=[(pad, pad), (pad, pad)],
        dimension_numbers=("NCHW", "OIHW", "NCHW"),
    )
    _, _, ho, wo = y.shape
    return y.reshape(B, C, ho, wo)


if __name__ == "__main__":
    key = jax.random.PRNGKey(0)
    x = jax.random.normal(key, (2, 4, 16, 16), dtype=jnp.float32)

    # Case 1: default BlurPool2d(kernel_size=3, stride=2).
    y = jax.block_until_ready(blurpool2d(x, kernel_size=3, stride=2))
    y_ref = _reference(x, 3, 2)
    assert y.shape == y_ref.shape, (y.shape, y_ref.shape)
    assert jnp.allclose(y, y_ref, atol=1e-5, rtol=1e-5), \
        float(jnp.max(jnp.abs(y - y_ref)))

    # Case 2: larger blur kernel with a tiny per-step byte target to exercise the
    # spatially tiled (multi grid-step, halo'd) path that large images take.
    y2 = jax.block_until_ready(
        blurpool2d(x, kernel_size=5, stride=2, block_bytes_target=32 * 1024))
    y2_ref = _reference(x, 5, 2)
    assert y2.shape == y2_ref.shape, (y2.shape, y2_ref.shape)
    assert jnp.allclose(y2, y2_ref, atol=1e-5, rtol=1e-5), \
        float(jnp.max(jnp.abs(y2 - y2_ref)))

    print("KERNEL_OK")
</pallas_src>

<mosaic_0001>
module attributes {stable_mosaic.version = 11 : i64} {
  func.func @_blurpool_kernel(%arg0: i32, %arg1: i32, %arg2: memref<1x36x9x1x1x128xf32, #tpu.memory_space<vmem>>, %arg3: memref<1x8x8x1x1x128xf32, #tpu.memory_space<vmem>>) attributes {dimension_semantics = [#tpu.dimension_semantics<parallel>, #tpu.dimension_semantics<parallel>], iteration_bounds = array<i64: 1, 1>, scalar_prefetch = 0 : i64, scratch_operands = 0 : i64, tpu.core_type = #tpu.core_type<tc>, window_params = [{transform_indices = @transform_0, window_bounds = array<i64: 1, 36, 9, 1, 1, 128>}, {transform_indices = @transform_1, window_bounds = array<i64: 1, 8, 8, 1, 1, 128>}]} {
    %c0 = arith.constant 0 : index
    %c0_0 = arith.constant 0 : index
    %c0_1 = arith.constant 0 : index
    %c0_2 = arith.constant 0 : index
    %c0_3 = arith.constant 0 : index
    %c0_4 = arith.constant 0 : index
    %0 = vector.load %arg2[%c0, %c0_0, %c0_1, %c0_2, %c0_3, %c0_4] : memref<1x36x9x1x1x128xf32, #tpu.memory_space<vmem>>, vector<1x9x8x1x1x128xf32>
    %1 = vector.shape_cast %0 : vector<1x9x8x1x1x128xf32> to vector<9x8x1x1x128xf32>
    %cst = arith.constant 2.500000e-01 : f32
    %2 = vector.broadcast %cst : f32 to vector<9x8x1x1x128xf32>
    %3 = arith.mulf %2, %1 : vector<9x8x1x1x128xf32>
    %c0_5 = arith.constant 0 : index
    %c9 = arith.constant 9 : index
    %c0_6 = arith.constant 0 : index
    %c0_7 = arith.constant 0 : index
    %c0_8 = arith.constant 0 : index
    %c0_9 = arith.constant 0 : index
    %4 = vector.load %arg2[%c0_5, %c9, %c0_6, %c0_7, %c0_8, %c0_9] : memref<1x36x9x1x1x128xf32, #tpu.memory_space<vmem>>, vector<1x9x8x1x1x128xf32>
    %5 = vector.shape_cast %4 : vector<1x9x8x1x1x128xf32> to vector<9x8x1x1x128xf32>
    %cst_10 = arith.constant 5.000000e-01 : f32
    %6 = vector.broadcast %cst_10 : f32 to vector<9x8x1x1x128xf32>
    %7 = arith.mulf %6, %5 : vector<9x8x1x1x128xf32>
    %8 = arith.addf %3, %7 : vector<9x8x1x1x128xf32>
    %c0_11 = arith.constant 0 : index
    %c0_12 = arith.constant 0 : index
    %c1 = arith.constant 1 : index
    %c0_13 = arith.constant 0 : index
    %c0_14 = arith.constant 0 : index
    %c0_15 = arith.constant 0 : index
    %9 = vector.load %arg2[%c0_11, %c0_12, %c1, %c0_13, %c0_14, %c0_15] : memref<1x36x9x1x1x128xf32, #tpu.memory_space<vmem>>, vector<1x9x8x1x1x128xf32>
    %10 = vector.shape_cast %9 : vector<1x9x8x1x1x128xf32> to vector<9x8x1x1x128xf32>
    %cst_16 = arith.constant 2.500000e-01 : f32
    %11 = vector.broadcast %cst_16 : f32 to vector<9x8x1x1x128xf32>
    %12 = arith.mulf %11, %10 : vector<9x8x1x1x128xf32>
    %13 = arith.addf %8, %12 : vector<9x8x1x1x128xf32>
    %c0_17 = arith.constant 0 : index
    %c18 = arith.constant 18 : index
    %c0_18 = arith.constant 0 : index
    %c0_19 = arith.constant 0 : index
    %c0_20 = arith.constant 0 : index
    %c0_21 = arith.constant 0 : index
    %14 = vector.load %arg2[%c0_17, %c18, %c0_18, %c0_19, %c0_20, %c0_21] : memref<1x36x9x1x1x128xf32, #tpu.memory_space<vmem>>, vector<1x9x8x1x1x128xf32>
    %15 = vector.shape_cast %14 : vector<1x9x8x1x1x128xf32> to vector<9x8x1x1x128xf32>
    %cst_22 = arith.constant 2.500000e-01 : f32
    %16 = vector.broadcast %cst_22 : f32 to vector<9x8x1x1x128xf32>
    %17 = arith.mulf %16, %15 : vector<9x8x1x1x128xf32>
    %c0_23 = arith.constant 0 : index
    %c27 = arith.constant 27 : index
    %c0_24 = arith.constant 0 : index
    %c0_25 = arith.constant 0 : index
    %c0_26 = arith.constant 0 : index
    %c0_27 = arith.constant 0 : index
    %18 = vector.load %arg2[%c0_23, %c27, %c0_24, %c0_25, %c0_26, %c0_27] : memref<1x36x9x1x1x128xf32, #tpu.memory_space<vmem>>, vector<1x9x8x1x1x128xf32>
    %19 = vector.shape_cast %18 : vector<1x9x8x1x1x128xf32> to vector<9x8x1x1x128xf32>
    %cst_28 = arith.constant 5.000000e-01 : f32
    %20 = vector.broadcast %cst_28 : f32 to vector<9x8x1x1x128xf32>
    %21 = arith.mulf %20, %19 : vector<9x8x1x1x128xf32>
    %22 = arith.addf %17, %21 : vector<9x8x1x1x128xf32>
    %c0_29 = arith.constant 0 : index
    %c18_30 = arith.constant 18 : index
    %c1_31 = arith.constant 1 : index
    %c0_32 = arith.constant 0 : index
    %c0_33 = arith.constant 0 : index
    %c0_34 = arith.constant 0 : index
    %23 = vector.load %arg2[%c0_29, %c18_30, %c1_31, %c0_32, %c0_33, %c0_34] : memref<1x36x9x1x1x128xf32, #tpu.memory_space<vmem>>, vector<1x9x8x1x1x128xf32>
    %24 = vector.shape_cast %23 : vector<1x9x8x1x1x128xf32> to vector<9x8x1x1x128xf32>
    %cst_35 = arith.constant 2.500000e-01 : f32
    %25 = vector.broadcast %cst_35 : f32 to vector<9x8x1x1x128xf32>
    %26 = arith.mulf %25, %24 : vector<9x8x1x1x128xf32>
    %27 = arith.addf %22, %26 : vector<9x8x1x1x128xf32>
    %28 = vector.extract_strided_slice %13 {offsets = [0, 0, 0, 0, 0], sizes = [8, 8, 1, 1, 128], strides = [1, 1, 1, 1, 1]} : vector<9x8x1x1x128xf32> to vector<8x8x1x1x128xf32>
    %cst_36 = arith.constant 2.500000e-01 : f32
    %29 = vector.broadcast %cst_36 : f32 to vector<8x8x1x1x128xf32>
    %30 = arith.mulf %29, %28 : vector<8x8x1x1x128xf32>
    %31 = vector.extract_strided_slice %27 {offsets = [0, 0, 0, 0, 0], sizes = [8, 8, 1, 1, 128], strides = [1, 1, 1, 1, 1]} : vector<9x8x1x1x128xf32> to vector<8x8x1x1x128xf32>
    %cst_37 = arith.constant 5.000000e-01 : f32
    %32 = vector.broadcast %cst_37 : f32 to vector<8x8x1x1x128xf32>
    %33 = arith.mulf %32, %31 : vector<8x8x1x1x128xf32>
    %34 = arith.addf %30, %33 : vector<8x8x1x1x128xf32>
    %35 = vector.extract_strided_slice %13 {offsets = [1, 0, 0, 0, 0], sizes = [8, 8, 1, 1, 128], strides = [1, 1, 1, 1, 1]} : vector<9x8x1x1x128xf32> to vector<8x8x1x1x128xf32>
    %cst_38 = arith.constant 2.500000e-01 : f32
    %36 = vector.broadcast %cst_38 : f32 to vector<8x8x1x1x128xf32>
    %37 = arith.mulf %36, %35 : vector<8x8x1x1x128xf32>
    %38 = arith.addf %34, %37 : vector<8x8x1x1x128xf32>
    %c0_39 = arith.constant 0 : index
    %c0_40 = arith.constant 0 : index
    %c0_41 = arith.constant 0 : index
    %c0_42 = arith.constant 0 : index
    %c0_43 = arith.constant 0 : index
    %c0_44 = arith.constant 0 : index
    %39 = vector.load %arg3[%c0_39, %c0_40, %c0_41, %c0_42, %c0_43, %c0_44] : memref<1x8x8x1x1x128xf32, #tpu.memory_space<vmem>>, vector<1x8x8x1x1x128xf32>
    %40 = vector.shape_cast %39 : vector<1x8x8x1x1x128xf32> to vector<8x8x1x1x128xf32>
    %41 = vector.shape_cast %38 : vector<8x8x1x1x128xf32> to vector<1x8x8x1x1x128xf32>
    tpu.vector_store %arg3[%c0_39, %c0_40, %c0_41, %c0_42, %c0_43, %c0_44], %41 {strides = array<i32>} : memref<1x8x8x1x1x128xf32, #tpu.memory_space<vmem>>, vector<1x8x8x1x1x128xf32>,
    return
  }
  func.func @transform_0(%arg0: i32, %arg1: i32) -> (i32, i32, i32, i32, i32, i32) {
    %c0_i32 = arith.constant 0 : i32
    %c0_i32_0 = arith.constant 0 : i32
    %c0_i32_1 = arith.constant 0 : i32
    %c0_i32_2 = arith.constant 0 : i32
    %c0_i32_3 = arith.constant 0 : i32
    return %arg0, %c0_i32, %c0_i32_0, %arg1, %c0_i32_1, %c0_i32_2 : i32, i32, i32, i32, i32, i32
  }
  func.func @transform_1(%arg0: i32, %arg1: i32) -> (i32, i32, i32, i32, i32, i32) {
    %c0_i32 = arith.constant 0 : i32
    %c0_i32_0 = arith.constant 0 : i32
    %c0_i32_1 = arith.constant 0 : i32
    %c0_i32_2 = arith.constant 0 : i32
    %c0_i32_3 = arith.constant 0 : i32
    return %arg0, %c0_i32, %c0_i32_0, %arg1, %c0_i32_1, %c0_i32_2 : i32, i32, i32, i32, i32, i32
  }
}

</mosaic_0001>

<llo_original>
// kernel: blurpool2d.1
$region0: #{blurpool2d.1}
  #allocation0 [shape = 'u32[]', space=smem, size = 0x4, offset = 0x4, fixed_abs, tag = 'smem constant byte address 0x4 - core index']
  #allocation1 [shape = 'u32[144,128]{1,0:T(1,128)}', space=vmem, size = 0x12000, scoped, tag = 'internal scratch']
  %s0 = inlined_call_operand.vmem [shape: f32[1,36,9,1,1,128], index: 0, kind: input, shape index: {}]
  %s1 = inlined_call_operand.vmem [shape: f32[1,8,8,1,1,128], index: 1, kind: output, shape index: {}]
  %s2 = sld [smem:[#allocation0]]
  $region14: #{blurpool2d.1} parent=0
    _
  %s4 = ssub.s32 1, %s2
  %s5 = scalar_select 0, %s4, %s2
  // Predicated region
  $region2: #{blurpool2d.1} parent=0 // pred_check
    _
  $region3: #{blurpool2d.1} parent=0 // pred_check_branch
    %7 = sbr.rel (0) target = $region5
  $region4: #{blurpool2d.1} parent=0 // pred_region
    _
  $region5: #{blurpool2d.1} parent=0 // pred_fallthru
    _
  %v8 = vld [vmem:[%s0] sm:$0x1]
  %v9 = vld [vmem:[%s0 + $0x1] sm:$0x1]
  %v10 = vld [vmem:[%s0 + $0x2] sm:$0x1]
  %v11 = vld [vmem:[%s0 + $0x3] sm:$0x1]
  %v12 = vld [vmem:[%s0 + $0x4] sm:$0x1]
  %v13 = vld [vmem:[%s0 + $0x5] sm:$0x1]
  %v14 = vld [vmem:[%s0 + $0x6] sm:$0x1]
  %v15 = vld [vmem:[%s0 + $0x7] sm:$0x1]
  %v16 = vld [vmem:[%s0 + $0x9] sm:$0x1]
  %v17 = vld [vmem:[%s0 + $0xa] sm:$0x1]
  %v18 = vld [vmem:[%s0 + $0xb] sm:$0x1]
  %v19 = vld [vmem:[%s0 + $0xc] sm:$0x1]
  %v20 = vld [vmem:[%s0 + $0xd] sm:$0x1]
  %v21 = vld [vmem:[%s0 + $0xe] sm:$0x1]
  %v22 = vld [vmem:[%s0 + $0xf] sm:$0x1]
  %v23 = vld [vmem:[%s0 + $0x10] sm:$0x1]
  %v24 = vld [vmem:[%s0 + $0x12] sm:$0x1]
  %v25 = vld [vmem:[%s0 + $0x13] sm:$0x1]
  %v26 = vld [vmem:[%s0 + $0x14] sm:$0x1]
  %v27 = vld [vmem:[%s0 + $0x15] sm:$0x1]
  %v28 = vld [vmem:[%s0 + $0x16] sm:$0x1]
  %v29 = vld [vmem:[%s0 + $0x17] sm:$0x1]
  %v30 = vld [vmem:[%s0 + $0x18] sm:$0x1]
  %v31 = vld [vmem:[%s0 + $0x19] sm:$0x1]
  %v32 = vld [vmem:[%s0 + $0x1b] sm:$0x1]
  %v33 = vld [vmem:[%s0 + $0x1c] sm:$0x1]
  %v34 = vld [vmem:[%s0 + $0x1d] sm:$0x1]
  %v35 = vld [vmem:[%s0 + $0x1e] sm:$0x1]
  %v36 = vld [vmem:[%s0 + $0x1f] sm:$0x1]
  %v37 = vld [vmem:[%s0 + $0x20] sm:$0x1]
  %v38 = vld [vmem:[%s0 + $0x21] sm:$0x1]
  %v39 = vld [vmem:[%s0 + $0x22] sm:$0x1]
  %v40 = vld [vmem:[%s0 + $0x24] sm:$0x1]
  %v41 = vld [vmem:[%s0 + $0x25] sm:$0x1]
  %v42 = vld [vmem:[%s0 + $0x26] sm:$0x1]
  %v43 = vld [vmem:[%s0 + $0x27] sm:$0x1]
  %v44 = vld [vmem:[%s0 + $0x28] sm:$0x1]
  %v45 = vld [vmem:[%s0 + $0x29] sm:$0x1]
  %v46 = vld [vmem:[%s0 + $0x2a] sm:$0x1]
  %v47 = vld [vmem:[%s0 + $0x2b] sm:$0x1]
  %v48 = vld [vmem:[%s0 + $0x2d] sm:$0x1]
  %v49 = vld [vmem:[%s0 + $0x2e] sm:$0x1]
  %v50 = vld [vmem:[%s0 + $0x2f] sm:$0x1]
  %v51 = vld [vmem:[%s0 + $0x30] sm:$0x1]
  %v52 = vld [vmem:[%s0 + $0x31] sm:$0x1]
  %v53 = vld [vmem:[%s0 + $0x32] sm:$0x1]
  %v54 = vld [vmem:[%s0 + $0x33] sm:$0x1]
  %v55 = vld [vmem:[%s0 + $0x34] sm:$0x1]
  %v56 = vld [vmem:[%s0 + $0x36] sm:$0x1]
  %v57 = vld [vmem:[%s0 + $0x37] sm:$0x1]
  %v58 = vld [vmem:[%s0 + $0x38] sm:$0x1]
  %v59 = vld [vmem:[%s0 + $0x39] sm:$0x1]
  %v60 = vld [vmem:[%s0 + $0x3a] sm:$0x1]
  %v61 = vld [vmem:[%s0 + $0x3b] sm:$0x1]
  %v62 = vld [vmem:[%s0 + $0x3c] sm:$0x1]
  %v63 = vld [vmem:[%s0 + $0x3d] sm:$0x1]
  %v64 = vld [vmem:[%s0 + $0x3f] sm:$0x1]
  %v65 = vld [vmem:[%s0 + $0x40] sm:$0x1]
  %v66 = vld [vmem:[%s0 + $0x41] sm:$0x1]
  %v67 = vld [vmem:[%s0 + $0x42] sm:$0x1]
  %v68 = vld [vmem:[%s0 + $0x43] sm:$0x1]
  %v69 = vld [vmem:[%s0 + $0x44] sm:$0x1]
  %v70 = vld [vmem:[%s0 + $0x45] sm:$0x1]
  %v71 = vld [vmem:[%s0 + $0x46] sm:$0x1]
  %v72 = vld [vmem:[%s0 + $0x48] sm:$0x1]
  %v73 = vld [vmem:[%s0 + $0x49] sm:$0x1]
  %v74 = vld [vmem:[%s0 + $0x4a] sm:$0x1]
  %v75 = vld [vmem:[%s0 + $0x4b] sm:$0x1]
  %v76 = vld [vmem:[%s0 + $0x4c] sm:$0x1]
  %v77 = vld [vmem:[%s0 + $0x4d] sm:$0x1]
  %v78 = vld [vmem:[%s0 + $0x4e] sm:$0x1]
  %v79 = vld [vmem:[%s0 + $0x4f] sm:$0x1]
  %v80 = vmul.f32 %v8, 0.25
  %v81 = vmul.f32 %v9, 0.25
  %v82 = vmul.f32 %v10, 0.25
  %v83 = vmul.f32 %v11, 0.25
  %v84 = vmul.f32 %v12, 0.25
  %v85 = vmul.f32 %v13, 0.25
  %v86 = vmul.f32 %v14, 0.25
  %v87 = vmul.f32 %v15, 0.25
  %v88 = vmul.f32 %v16, 0.25
  %v89 = vmul.f32 %v17, 0.25
  %v90 = vmul.f32 %v18, 0.25
  %v91 = vmul.f32 %v19, 0.25
  %v92 = vmul.f32 %v20, 0.25
  %v93 = vmul.f32 %v21, 0.25
  %v94 = vmul.f32 %v22, 0.25
  %v95 = vmul.f32 %v23, 0.25
  %v96 = vmul.f32 %v24, 0.25
  %v97 = vmul.f32 %v25, 0.25
  %v98 = vmul.f32 %v26, 0.25
  %v99 = vmul.f32 %v27, 0.25
  %v100 = vmul.f32 %v28, 0.25
  %v101 = vmul.f32 %v29, 0.25
  %v102 = vmul.f32 %v30, 0.25
  %v103 = vmul.f32 %v31, 0.25
  %v104 = vmul.f32 %v32, 0.25
  %v105 = vmul.f32 %v33, 0.25
  %v106 = vmul.f32 %v34, 0.25
  %v107 = vmul.f32 %v35, 0.25
  %v108 = vmul.f32 %v36, 0.25
  %v109 = vmul.f32 %v37, 0.25
  %v110 = vmul.f32 %v38, 0.25
  %v111 = vmul.f32 %v39, 0.25
  %v112 = vmul.f32 %v40, 0.25
  %v113 = vmul.f32 %v41, 0.25
  %v114 = vmul.f32 %v42, 0.25
  %v115 = vmul.f32 %v43, 0.25
  %v116 = vmul.f32 %v44, 0.25
  %v117 = vmul.f32 %v45, 0.25
  %v118 = vmul.f32 %v46, 0.25
  %v119 = vmul.f32 %v47, 0.25
  %v120 = vmul.f32 %v48, 0.25
  %v121 = vmul.f32 %v49, 0.25
  %v122 = vmul.f32 %v50, 0.25
  %v123 = vmul.f32 %v51, 0.25
  %v124 = vmul.f32 %v52, 0.25
  %v125 = vmul.f32 %v53, 0.25
  %v126 = vmul.f32 %v54, 0.25
  %v127 = vmul.f32 %v55, 0.25
  %v128 = vmul.f32 %v56, 0.25
  %v129 = vmul.f32 %v57, 0.25
  %v130 = vmul.f32 %v58, 0.25
  %v131 = vmul.f32 %v59, 0.25
  %v132 = vmul.f32 %v60, 0.25
  %v133 = vmul.f32 %v61, 0.25
  %v134 = vmul.f32 %v62, 0.25
  %v135 = vmul.f32 %v63, 0.25
  %v136 = vmul.f32 %v64, 0.25
  %v137 = vmul.f32 %v65, 0.25
  %v138 = vmul.f32 %v66, 0.25
  %v139 = vmul.f32 %v67, 0.25
  %v140 = vmul.f32 %v68, 0.25
  %v141 = vmul.f32 %v69, 0.25
  %v142 = vmul.f32 %v70, 0.25
  %v143 = vmul.f32 %v71, 0.25
  %v144 = vmul.f32 %v72, 0.25
  %v145 = vmul.f32 %v73, 0.25
  %v146 = vmul.f32 %v74, 0.25
  %v147 = vmul.f32 %v75, 0.25
  %v148 = vmul.f32 %v76, 0.25
  %v149 = vmul.f32 %v77, 0.25
  %v150 = vmul.f32 %v78, 0.25
  %v151 = vmul.f32 %v79, 0.25
  %s152 = scalar_lea.vmem %s0, 81
  %v153 = vld [vmem:[%s152] sm:$0x1]
  %v154 = vld [vmem:[%s152 + $0x1] sm:$0x1]
  %v155 = vld [vmem:[%s152 + $0x2] sm:$0x1]
  %v156 = vld [vmem:[%s152 + $0x3] sm:$0x1]
  %v157 = vld [vmem:[%s152 + $0x4] sm:$0x1]
  %v158 = vld [vmem:[%s152 + $0x5] sm:$0x1]
  %v159 = vld [vmem:[%s152 + $0x6] sm:$0x1]
  %v160 = vld [vmem:[%s152 + $0x7] sm:$0x1]
  %v161 = vld [vmem:[%s152 + $0x9] sm:$0x1]
  %v162 = vld [vmem:[%s152 + $0xa] sm:$0x1]
  %v163 = vld [vmem:[%s152 + $0xb] sm:$0x1]
  %v164 = vld [vmem:[%s152 + $0xc] sm:$0x1]
  %v165 = vld [vmem:[%s152 + $0xd] sm:$0x1]
  %v166 = vld [vmem:[%s152 + $0xe] sm:$0x1]
  %v167 = vld [vmem:[%s152 + $0xf] sm:$0x1]
  %v168 = vld [vmem:[%s152 + $0x10] sm:$0x1]
  %v169 = vld [vmem:[%s152 + $0x12] sm:$0x1]
  %v170 = vld [vmem:[%s152 + $0x13] sm:$0x1]
  %v171 = vld [vmem:[%s152 + $0x14] sm:$0x1]
  %v172 = vld [vmem:[%s152 + $0x15] sm:$0x1]
  %v173 = vld [vmem:[%s152 + $0x16] sm:$0x1]
  %v174 = vld [vmem:[%s152 + $0x17] sm:$0x1]
  %v175 = vld [vmem:[%s152 + $0x18] sm:$0x1]
  %v176 = vld [vmem:[%s152 + $0x19] sm:$0x1]
  %v177 = vld [vmem:[%s152 + $0x1b] sm:$0x1]
  %v178 = vld [vmem:[%s152 + $0x1c] sm:$0x1]
  %v179 = vld [vmem:[%s152 + $0x1d] sm:$0x1]
  %v180 = vld [vmem:[%s152 + $0x1e] sm:$0x1]
  %v181 = vld [vmem:[%s152 + $0x1f] sm:$0x1]
  %v182 = vld [vmem:[%s152 + $0x20] sm:$0x1]
  %v183 = vld [vmem:[%s152 + $0x21] sm:$0x1]
  %v184 = vld [vmem:[%s152 + $0x22] sm:$0x1]
  %v185 = vld [vmem:[%s152 + $0x24] sm:$0x1]
  %v186 = vld [vmem:[%s152 + $0x25] sm:$0x1]
  %v187 = vld [vmem:[%s152 + $0x26] sm:$0x1]
  %v188 = vld [vmem:[%s152 + $0x27] sm:$0x1]
  %v189 = vld [vmem:[%s152 + $0x28] sm:$0x1]
  %v190 = vld [vmem:[%s152 + $0x29] sm:$0x1]
  %v191 = vld [vmem:[%s152 + $0x2a] sm:$0x1]
  %v192 = vld [vmem:[%s152 + $0x2b] sm:$0x1]
  %v193 = vld [vmem:[%s152 + $0x2d] sm:$0x1]
  %v194 = vld [vmem:[%s152 + $0x2e] sm:$0x1]
  %v195 = vld [vmem:[%s152 + $0x2f] sm:$0x1]
  %v196 = vld [vmem:[%s152 + $0x30] sm:$0x1]
  %v197 = vld [vmem:[%s152 + $0x31] sm:$0x1]
  %v198 = vld [vmem:[%s152 + $0x32] sm:$0x1]
  %v199 = vld [vmem:[%s152 + $0x33] sm:$0x1]
  %v200 = vld [vmem:[%s152 + $0x34] sm:$0x1]
  %v201 = vld [vmem:[%s152 + $0x36] sm:$0x1]
  %v202 = vld [vmem:[%s152 + $0x37] sm:$0x1]
  %v203 = vld [vmem:[%s152 + $0x38] sm:$0x1]
  %v204 = vld [vmem:[%s152 + $0x39] sm:$0x1]
  %v205 = vld [vmem:[%s152 + $0x3a] sm:$0x1]
  %v206 = vld [vmem:[%s152 + $0x3b] sm:$0x1]
  %v207 = vld [vmem:[%s152 + $0x3c] sm:$0x1]
  %v208 = vld [vmem:[%s152 + $0x3d] sm:$0x1]
  %v209 = vld [vmem:[%s152 + $0x3f] sm:$0x1]
  %v210 = vld [vmem:[%s152 + $0x40] sm:$0x1]
  %v211 = vld [vmem:[%s152 + $0x41] sm:$0x1]
  %v212 = vld [vmem:[%s152 + $0x42] sm:$0x1]
  %v213 = vld [vmem:[%s152 + $0x43] sm:$0x1]
  %v214 = vld [vmem:[%s152 + $0x44] sm:$0x1]
  %v215 = vld [vmem:[%s152 + $0x45] sm:$0x1]
  %v216 = vld [vmem:[%s152 + $0x46] sm:$0x1]
  %v217 = vld [vmem:[%s152 + $0x48] sm:$0x1]
  %v218 = vld [vmem:[%s152 + $0x49] sm:$0x1]
  %v219 = vld [vmem:[%s152 + $0x4a] sm:$0x1]
  %v220 = vld [vmem:[%s152 + $0x4b] sm:$0x1]
  %v221 = vld [vmem:[%s152 + $0x4c] sm:$0x1]
  %v222 = vld [vmem:[%s152 + $0x4d] sm:$0x1]
  %v223 = vld [vmem:[%s152 + $0x4e] sm:$0x1]
  %v224 = vld [vmem:[%s152 + $0x4f] sm:$0x1]
  %v225 = vmul.f32 %v153, 0.5
  %v226 = vmul.f32 %v154, 0.5
  %v227 = vmul.f32 %v155, 0.5
  %v228 = vmul.f32 %v156, 0.5
  %v229 = vmul.f32 %v157, 0.5
  %v230 = vmul.f32 %v158, 0.5
  %v231 = vmul.f32 %v159, 0.5
  %v232 = vmul.f32 %v160, 0.5
  %v233 = vmul.f32 %v161, 0.5
  %v234 = vmul.f32 %v162, 0.5
  %v235 = vmul.f32 %v163, 0.5
  %v236 = vmul.f32 %v164, 0.5
  %v237 = vmul.f32 %v165, 0.5
  %v238 = vmul.f32 %v166, 0.5
  %v239 = vmul.f32 %v167, 0.5
  %v240 = vmul.f32 %v168, 0.5
  %v241 = vmul.f32 %v169, 0.5
  %v242 = vmul.f32 %v170, 0.5
  %v243 = vmul.f32 %v171, 0.5
  %v244 = vmul.f32 %v172, 0.5
  %v245 = vmul.f32 %v173, 0.5
  %v246 = vmul.f32 %v174, 0.5
  %v247 = vmul.f32 %v175, 0.5
  %v248 = vmul.f32 %v176, 0.5
  %v249 = vmul.f32 %v177, 0.5
  %v250 = vmul.f32 %v178, 0.5
  %v251 = vmul.f32 %v179, 0.5
  %v252 = vmul.f32 %v180, 0.5
  %v253 = vmul.f32 %v181, 0.5
  %v254 = vmul.f32 %v182, 0.5
  %v255 = vmul.f32 %v183, 0.5
  %v256 = vmul.f32 %v184, 0.5
  %v257 = vmul.f32 %v185, 0.5
  %v258 = vmul.f32 %v186, 0.5
  %v259 = vmul.f32 %v187, 0.5
  %v260 = vmul.f32 %v188, 0.5
  %v261 = vmul.f32 %v189, 0.5
  %v262 = vmul.f32 %v190, 0.5
  %v263 = vmul.f32 %v191, 0.5
  %v264 = vmul.f32 %v192, 0.5
  %v265 = vmul.f32 %v193, 0.5
  %v266 = vmul.f32 %v194, 0.5
  %v267 = vmul.f32 %v195, 0.5
  %v268 = vmul.f32 %v196, 0.5
  %v269 = vmul.f32 %v197, 0.5
  %v270 = vmul.f32 %v198, 0.5
  %v271 = vmul.f32 %v199, 0.5
  %v272 = vmul.f32 %v200, 0.5
  %v273 = vmul.f32 %v201, 0.5
  %v274 = vmul.f32 %v202, 0.5
  %v275 = vmul.f32 %v203, 0.5
  %v276 = vmul.f32 %v204, 0.5
  %v277 = vmul.f32 %v205, 0.5
  %v278 = vmul.f32 %v206, 0.5
  %v279 = vmul.f32 %v207, 0.5
  %v280 = vmul.f32 %v208, 0.5
  %v281 = vmul.f32 %v209, 0.5
  %v282 = vmul.f32 %v210, 0.5
  %v283 = vmul.f32 %v211, 0.5
  %v284 = vmul.f32 %v212, 0.5
  %v285 = vmul.f32 %v213, 0.5
  %v286 = vmul.f32 %v214, 0.5
  %v287 = vmul.f32 %v215, 0.5
  %v288 = vmul.f32 %v216, 0.5
  %v289 = vmul.f32 %v217, 0.5
  %v290 = vmul.f32 %v218, 0.5
  %v291 = vmul.f32 %v219, 0.5
  %v292 = vmul.f32 %v220, 0.5
  %v293 = vmul.f32 %v221, 0.5
  %v294 = vmul.f32 %v222, 0.5
  %v295 = vmul.f32 %v223, 0.5
  %v296 = vmul.f32 %v224, 0.5
  %v297 = vadd.f32 %v80, %v225
  %v298 = vadd.f32 %v81, %v226
  %v299 = vadd.f32 %v82, %v227
  %v300 = vadd.f32 %v83, %v228
  %v301 = vadd.f32 %v84, %v229
  %v302 = vadd.f32 %v85, %v230
  %v303 = vadd.f32 %v86, %v231
  %v304 = vadd.f32 %v87, %v232
  %v305 = vadd.f32 %v88, %v233
  %v306 = vadd.f32 %v89, %v234
  %v307 = vadd.f32 %v90, %v235
  %v308 = vadd.f32 %v91, %v236
  %v309 = vadd.f32 %v92, %v237
  %v310 = vadd.f32 %v93, %v238
  %v311 = vadd.f32 %v94, %v239
  %v312 = vadd.f32 %v95, %v240
  %v313 = vadd.f32 %v96, %v241
  %v314 = vadd.f32 %v97, %v242
  %v315 = vadd.f32 %v98, %v243
  %v316 = vadd.f32 %v99, %v244
  %v317 = vadd.f32 %v100, %v245
  %v318 = vadd.f32 %v101, %v246
  %v319 = vadd.f32 %v102, %v247
  %v320 = vadd.f32 %v103, %v248
  %v321 = vadd.f32 %v104, %v249
  %v322 = vadd.f32 %v105, %v250
  %v323 = vadd.f32 %v106, %v251
  %v324 = vadd.f32 %v107, %v252
  %v325 = vadd.f32 %v108, %v253
  %v326 = vadd.f32 %v109, %v254
  %v327 = vadd.f32 %v110, %v255
  %v328 = vadd.f32 %v111, %v256
  %v329 = vadd.f32 %v112, %v257
  %v330 = vadd.f32 %v113, %v258
  %v331 = vadd.f32 %v114, %v259
  %v332 = vadd.f32 %v115, %v260
  %v333 = vadd.f32 %v116, %v261
  %v334 = vadd.f32 %v117, %v262
  %v335 = vadd.f32 %v118, %v263
  %v336 = vadd.f32 %v119, %v264
  %v337 = vadd.f32 %v120, %v265
  %v338 = vadd.f32 %v121, %v266
  %v339 = vadd.f32 %v122, %v267
  %v340 = vadd.f32 %v123, %v268
  %v341 = vadd.f32 %v124, %v269
  %v342 = vadd.f32 %v125, %v270
  %v343 = vadd.f32 %v126, %v271
  %v344 = vadd.f32 %v127, %v272
  %v345 = vadd.f32 %v128, %v273
  %v346 = vadd.f32 %v129, %v274
  %v347 = vadd.f32 %v130, %v275
  %v348 = vadd.f32 %v131, %v276
  %v349 = vadd.f32 %v132, %v277
  %v350 = vadd.f32 %v133, %v278
  %v351 = vadd.f32 %v134, %v279
  %v352 = vadd.f32 %v135, %v280
  %v353 = vadd.f32 %v136, %v281
  %v354 = vadd.f32 %v137, %v282
  %v355 = vadd.f32 %v138, %v283
  %v356 = vadd.f32 %v139, %v284
  %v357 = vadd.f32 %v140, %v285
  %v358 = vadd.f32 %v141, %v286
  %v359 = vadd.f32 %v142, %v287
  %v360 = vadd.f32 %v143, %v288
  %v361 = vadd.f32 %v144, %v289
  %v362 = vadd.f32 %v145, %v290
  %v363 = vadd.f32 %v146, %v291
  %v364 = vadd.f32 %v147, %v292
  %v365 = vadd.f32 %v148, %v293
  %v366 = vadd.f32 %v149, %v294
  %v367 = vadd.f32 %v150, %v295
  %v368 = vadd.f32 %v151, %v296
  %s369 = scalar_lea.vmem %s0, 1
  %v370 = vld [vmem:[%s369] sm:$0x1]
  %v371 = vld [vmem:[%s369 + $0x1] sm:$0x1]
  %v372 = vld [vmem:[%s369 + $0x2] sm:$0x1]
  %v373 = vld [vmem:[%s369 + $0x3] sm:$0x1]
  %v374 = vld [vmem:[%s369 + $0x4] sm:$0x1]
  %v375 = vld [vmem:[%s369 + $0x5] sm:$0x1]
  %v376 = vld [vmem:[%s369 + $0x6] sm:$0x1]
  %v377 = vld [vmem:[%s369 + $0x7] sm:$0x1]
  %v378 = vld [vmem:[%s369 + $0x9] sm:$0x1]
  %v379 = vld [vmem:[%s369 + $0xa] sm:$0x1]
  %v380 = vld [vmem:[%s369 + $0xb] sm:$0x1]
  %v381 = vld [vmem:[%s369 + $0xc] sm:$0x1]
  %v382 = vld [vmem:[%s369 + $0xd] sm:$0x1]
  %v383 = vld [vmem:[%s369 + $0xe] sm:$0x1]
  %v384 = vld [vmem:[%s369 + $0xf] sm:$0x1]
  %v385 = vld [vmem:[%s369 + $0x10] sm:$0x1]
  %v386 = vld [vmem:[%s369 + $0x12] sm:$0x1]
  %v387 = vld [vmem:[%s369 + $0x13] sm:$0x1]
  %v388 = vld [vmem:[%s369 + $0x14] sm:$0x1]
  %v389 = vld [vmem:[%s369 + $0x15] sm:$0x1]
  %v390 = vld [vmem:[%s369 + $0x16] sm:$0x1]
  %v391 = vld [vmem:[%s369 + $0x17] sm:$0x1]
  %v392 = vld [vmem:[%s369 + $0x18] sm:$0x1]
  %v393 = vld [vmem:[%s369 + $0x19] sm:$0x1]
  %v394 = vld [vmem:[%s369 + $0x1b] sm:$0x1]
  %v395 = vld [vmem:[%s369 + $0x1c] sm:$0x1]
  %v396 = vld [vmem:[%s369 + $0x1d] sm:$0x1]
  %v397 = vld [vmem:[%s369 + $0x1e] sm:$0x1]
  %v398 = vld [vmem:[%s369 + $0x1f] sm:$0x1]
  %v399 = vld [vmem:[%s369 + $0x20] sm:$0x1]
  %v400 = vld [vmem:[%s369 + $0x21] sm:$0x1]
  %v401 = vld [vmem:[%s369 + $0x22] sm:$0x1]
  %v402 = vld [vmem:[%s369 + $0x24] sm:$0x1]
  %v403 = vld [vmem:[%s369 + $0x25] sm:$0x1]
  %v404 = vld [vmem:[%s369 + $0x26] sm:$0x1]
  %v405 = vld [vmem:[%s369 + $0x27] sm:$0x1]
  %v406 = vld [vmem:[%s369 + $0x28] sm:$0x1]
  %v407 = vld [vmem:[%s369 + $0x29] sm:$0x1]
  %v408 = vld [vmem:[%s369 + $0x2a] sm:$0x1]
  %v409 = vld [vmem:[%s369 + $0x2b] sm:$0x1]
  %v410 = vld [vmem:[%s369 + $0x2d] sm:$0x1]
  %v411 = vld [vmem:[%s369 + $0x2e] sm:$0x1]
  %v412 = vld [vmem:[%s369 + $0x2f] sm:$0x1]
  %v413 = vld [vmem:[%s369 + $0x30] sm:$0x1]
  %v414 = vld [vmem:[%s369 + $0x31] sm:$0x1]
  %v415 = vld [vmem:[%s369 + $0x32] sm:$0x1]
  %v416 = vld [vmem:[%s369 + $0x33] sm:$0x1]
  %v417 = vld [vmem:[%s369 + $0x34] sm:$0x1]
  %v418 = vld [vmem:[%s369 + $0x36] sm:$0x1]
  %v419 = vld [vmem:[%s369 + $0x37] sm:$0x1]
  %v420 = vld [vmem:[%s369 + $0x38] sm:$0x1]
  %v421 = vld [vmem:[%s369 + $0x39] sm:$0x1]
  %v422 = vld [vmem:[%s369 + $0x3a] sm:$0x1]
  %v423 = vld [vmem:[%s369 + $0x3b] sm:$0x1]
  %v424 = vld [vmem:[%s369 + $0x3c] sm:$0x1]
  %v425 = vld [vmem:[%s369 + $0x3d] sm:$0x1]
  %v426 = vld [vmem:[%s369 + $0x3f] sm:$0x1]
  %v427 = vld [vmem:[%s369 + $0x40] sm:$0x1]
  %v428 = vld [vmem:[%s369 + $0x41] sm:$0x1]
  %v429 = vld [vmem:[%s369 + $0x42] sm:$0x1]
  %v430 = vld [vmem:[%s369 + $0x43] sm:$0x1]
  %v431 = vld [vmem:[%s369 + $0x44] sm:$0x1]
  %v432 = vld [vmem:[%s369 + $0x45] sm:$0x1]
  %v433 = vld [vmem:[%s369 + $0x46] sm:$0x1]
  %v434 = vld [vmem:[%s369 + $0x48] sm:$0x1]
  %v435 = vld [vmem:[%s369 + $0x49] sm:$0x1]
  %v436 = vld [vmem:[%s369 + $0x4a] sm:$0x1]
  %v437 = vld [vmem:[%s369 + $0x4b] sm:$0x1]
  %v438 = vld [vmem:[%s369 + $0x4c] sm:$0x1]
  %v439 = vld [vmem:[%s369 + $0x4d] sm:$0x1]
  %v440 = vld [vmem:[%s369 + $0x4e] sm:$0x1]
  %v441 = vld [vmem:[%s369 + $0x4f] sm:$0x1]
  %v442 = vmul.f32 %v370, 0.25
  %v443 = vmul.f32 %v371, 0.25
  %v444 = vmul.f32 %v372, 0.25
  %v445 = vmul.f32 %v373, 0.25
  %v446 = vmul.f32 %v374, 0.25
  %v447 = vmul.f32 %v375, 0.25
  %v448 = vmul.f32 %v376, 0.25
  %v449 = vmul.f32 %v377, 0.25
  %v450 = vmul.f32 %v378, 0.25
  %v451 = vmul.f32 %v379, 0.25
  %v452 = vmul.f32 %v380, 0.25
  %v453 = vmul.f32 %v381, 0.25
  %v454 = vmul.f32 %v382, 0.25
  %v455 = vmul.f32 %v383, 0.25
  %v456 = vmul.f32 %v384, 0.25
  %v457 = vmul.f32 %v385, 0.25
  %v458 = vmul.f32 %v386, 0.25
  %v459 = vmul.f32 %v387, 0.25
  %v460 = vmul.f32 %v388, 0.25
  %v461 = vmul.f32 %v389, 0.25
  %v462 = vmul.f32 %v390, 0.25
  %v463 = vmul.f32 %v391, 0.25
  %v464 = vmul.f32 %v392, 0.25
  %v465 = vmul.f32 %v393, 0.25
  %v466 = vmul.f32 %v394, 0.25
  %v467 = vmul.f32 %v395, 0.25
  %v468 = vmul.f32 %v396, 0.25
  %v469 = vmul.f32 %v397, 0.25
  %v470 = vmul.f32 %v398, 0.25
  %v471 = vmul.f32 %v399, 0.25
  %v472 = vmul.f32 %v400, 0.25
  %v473 = vmul.f32 %v401, 0.25
  %v474 = vmul.f32 %v402, 0.25
  %v475 = vmul.f32 %v403, 0.25
  %v476 = vmul.f32 %v404, 0.25
  %v477 = vmul.f32 %v405, 0.25
  %v478 = vmul.f32 %v406, 0.25
  %v479 = vmul.f32 %v407, 0.25
  %v480 = vmul.f32 %v408, 0.25
  %v481 = vmul.f32 %v409, 0.25
  %v482 = vmul.f32 %v410, 0.25
  %v483 = vmul.f32 %v411, 0.25
  %v484 = vmul.f32 %v412, 0.25
  %v485 = vmul.f32 %v413, 0.25
  %v486 = vmul.f32 %v414, 0.25
  %v487 = vmul.f32 %v415, 0.25
  %v488 = vmul.f32 %v416, 0.25
  %v489 = vmul.f32 %v417, 0.25
  %v490 = vmul.f32 %v418, 0.25
  %v491 = vmul.f32 %v419, 0.25
  %v492 = vmul.f32 %v420, 0.25
  %v493 = vmul.f32 %v421, 0.25
  %v494 = vmul.f32 %v422, 0.25
  %v495 = vmul.f32 %v423, 0.25
  %v496 = vmul.f32 %v424, 0.25
  %v497 = vmul.f32 %v425, 0.25
  %v498 = vmul.f32 %v426, 0.25
  %v499 = vmul.f32 %v427, 0.25
  %v500 = vmul.f32 %v428, 0.25
  %v501 = vmul.f32 %v429, 0.25
  %v502 = vmul.f32 %v430, 0.25
  %v503 = vmul.f32 %v431, 0.25
  %v504 = vmul.f32 %v432, 0.25
  %v505 = vmul.f32 %v433, 0.25
  %v506 = vmul.f32 %v434, 0.25
  %v507 = vmul.f32 %v435, 0.25
  %v508 = vmul.f32 %v436, 0.25
  %v509 = vmul.f32 %v437, 0.25
  %v510 = vmul.f32 %v438, 0.25
  %v511 = vmul.f32 %v439, 0.25
  %v512 = vmul.f32 %v440, 0.25
  %v513 = vmul.f32 %v441, 0.25
  %v514 = vadd.f32 %v297, %v442
  %v515 = vadd.f32 %v298, %v443
  %v516 = vadd.f32 %v299, %v444
  %v517 = vadd.f32 %v300, %v445
  %v518 = vadd.f32 %v301, %v446
  %v519 = vadd.f32 %v302, %v447
  %v520 = vadd.f32 %v303, %v448
  %v521 = vadd.f32 %v304, %v449
  %v522 = vadd.f32 %v305, %v450
  %v523 = vadd.f32 %v306, %v451
  %v524 = vadd.f32 %v307, %v452
  %v525 = vadd.f32 %v308, %v453
  %v526 = vadd.f32 %v309, %v454
  %v527 = vadd.f32 %v310, %v455
  %v528 = vadd.f32 %v311, %v456
  %v529 = vadd.f32 %v312, %v457
  %v530 = vadd.f32 %v313, %v458
  %v531 = vadd.f32 %v314, %v459
  %v532 = vadd.f32 %v315, %v460
  %v533 = vadd.f32 %v316, %v461
  %v534 = vadd.f32 %v317, %v462
  %v535 = vadd.f32 %v318, %v463
  %v536 = vadd.f32 %v319, %v464
  %v537 = vadd.f32 %v320, %v465
  %v538 = vadd.f32 %v321, %v466
  %v539 = vadd.f32 %v322, %v467
  %v540 = vadd.f32 %v323, %v468
  %v541 = vadd.f32 %v324, %v469
  %v542 = vadd.f32 %v325, %v470
  %v543 = vadd.f32 %v326, %v471
  %v544 = vadd.f32 %v327, %v472
  %v545 = vadd.f32 %v328, %v473
  %v546 = vadd.f32 %v329, %v474
  %v547 = vadd.f32 %v330, %v475
  %v548 = vadd.f32 %v331, %v476
  %v549 = vadd.f32 %v332, %v477
  %v550 = vadd.f32 %v333, %v478
  %v551 = vadd.f32 %v334, %v479
  %v552 = vadd.f32 %v335, %v480
  %v553 = vadd.f32 %v336, %v481
  %v554 = vadd.f32 %v337, %v482
  %v555 = vadd.f32 %v338, %v483
  %v556 = vadd.f32 %v339, %v484
  %v557 = vadd.f32 %v340, %v485
  %v558 = vadd.f32 %v341, %v486
  %v559 = vadd.f32 %v342, %v487
  %v560 = vadd.f32 %v343, %v488
  %v561 = vadd.f32 %v344, %v489
  %v562 = vadd.f32 %v345, %v490
  %v563 = vadd.f32 %v346, %v491
  %v564 = vadd.f32 %v347, %v492
  %v565 = vadd.f32 %v348, %v493
  %v566 = vadd.f32 %v349, %v494
  %v567 = vadd.f32 %v350, %v495
  %v568 = vadd.f32 %v351, %v496
  %v569 = vadd.f32 %v352, %v497
  %v570 = vadd.f32 %v353, %v498
  %v571 = vadd.f32 %v354, %v499
  %v572 = vadd.f32 %v355, %v500
  %v573 = vadd.f32 %v356, %v501
  %v574 = vadd.f32 %v357, %v502
  %v575 = vadd.f32 %v358, %v503
  %v576 = vadd.f32 %v359, %v504
  %v577 = vadd.f32 %v360, %v505
  %v578 = vadd.f32 %v361, %v506
  %v579 = vadd.f32 %v362, %v507
  %v580 = vadd.f32 %v363, %v508
  %v581 = vadd.f32 %v364, %v509
  %v582 = vadd.f32 %v365, %v510
  %v583 = vadd.f32 %v366, %v511
  %v584 = vadd.f32 %v367, %v512
  %v585 = vadd.f32 %v368, %v513
  %s586 = scalar_lea.vmem %s0, 162
  %v587 = vld [vmem:[%s586] sm:$0x1]
  %v588 = vld [vmem:[%s586 + $0x1] sm:$0x1]
  %v589 = vld [vmem:[%s586 + $0x2] sm:$0x1]
  %v590 = vld [vmem:[%s586 + $0x3] sm:$0x1]
  %v591 = vld [vmem:[%s586 + $0x4] sm:$0x1]
  %v592 = vld [vmem:[%s586 + $0x5] sm:$0x1]
  %v593 = vld [vmem:[%s586 + $0x6] sm:$0x1]
  %v594 = vld [vmem:[%s586 + $0x7] sm:$0x1]
  %v595 = vld [vmem:[%s586 + $0x9] sm:$0x1]
  %v596 = vld [vmem:[%s586 + $0xa] sm:$0x1]
  %v597 = vld [vmem:[%s586 + $0xb] sm:$0x1]
  %v598 = vld [vmem:[%s586 + $0xc] sm:$0x1]
  %v599 = vld [vmem:[%s586 + $0xd] sm:$0x1]
  %v600 = vld [vmem:[%s586 + $0xe] sm:$0x1]
  %v601 = vld [vmem:[%s586 + $0xf] sm:$0x1]
  %v602 = vld [vmem:[%s586 + $0x10] sm:$0x1]
  %v603 = vld [vmem:[%s586 + $0x12] sm:$0x1]
  %v604 = vld [vmem:[%s586 + $0x13] sm:$0x1]
  %v605 = vld [vmem:[%s586 + $0x14] sm:$0x1]
  %v606 = vld [vmem:[%s586 + $0x15] sm:$0x1]
  %v607 = vld [vmem:[%s586 + $0x16] sm:$0x1]
  %v608 = vld [vmem:[%s586 + $0x17] sm:$0x1]
  %v609 = vld [vmem:[%s586 + $0x18] sm:$0x1]
  %v610 = vld [vmem:[%s586 + $0x19] sm:$0x1]
  %v611 = vld [vmem:[%s586 + $0x1b] sm:$0x1]
  %v612 = vld [vmem:[%s586 + $0x1c] sm:$0x1]
  %v613 = vld [vmem:[%s586 + $0x1d] sm:$0x1]
  %v614 = vld [vmem:[%s586 + $0x1e] sm:$0x1]
  %v615 = vld [vmem:[%s586 + $0x1f] sm:$0x1]
  %v616 = vld [vmem:[%s586 + $0x20] sm:$0x1]
  %v617 = vld [vmem:[%s586 + $0x21] sm:$0x1]
  %v618 = vld [vmem:[%s586 + $0x22] sm:$0x1]
  %v619 = vld [vmem:[%s586 + $0x24] sm:$0x1]
  %v620 = vld [vmem:[%s586 + $0x25] sm:$0x1]
  %v621 = vld [vmem:[%s586 + $0x26] sm:$0x1]
  %v622 = vld [vmem:[%s586 + $0x27] sm:$0x1]
  %v623 = vld [vmem:[%s586 + $0x28] sm:$0x1]
  %v624 = vld [vmem:[%s586 + $0x29] sm:$0x1]
  %v625 = vld [vmem:[%s586 + $0x2a] sm:$0x1]
  %v626 = vld [vmem:[%s586 + $0x2b] sm:$0x1]
  %v627 = vld [vmem:[%s586 + $0x2d] sm:$0x1]
  %v628 = vld [vmem:[%s586 + $0x2e] sm:$0x1]
  %v629 = vld [vmem:[%s586 + $0x2f] sm:$0x1]
  %v630 = vld [vmem:[%s586 + $0x30] sm:$0x1]
  %v631 = vld [vmem:[%s586 + $0x31] sm:$0x1]
  %v632 = vld [vmem:[%s586 + $0x32] sm:$0x1]
  %v633 = vld [vmem:[%s586 + $0x33] sm:$0x1]
  %v634 = vld [vmem:[%s586 + $0x34] sm:$0x1]
  %v635 = vld [vmem:[%s586 + $0x36] sm:$0x1]
  %v636 = vld [vmem:[%s586 + $0x37] sm:$0x1]
  %v637 = vld [vmem:[%s586 + $0x38] sm:$0x1]
  %v638 = vld [vmem:[%s586 + $0x39] sm:$0x1]
  %v639 = vld [vmem:[%s586 + $0x3a] sm:$0x1]
  %v640 = vld [vmem:[%s586 + $0x3b] sm:$0x1]
  %v641 = vld [vmem:[%s586 + $0x3c] sm:$0x1]
  %v642 = vld [vmem:[%s586 + $0x3d] sm:$0x1]
  %v643 = vld [vmem:[%s586 + $0x3f] sm:$0x1]
  %v644 = vld [vmem:[%s586 + $0x40] sm:$0x1]
  %v645 = vld [vmem:[%s586 + $0x41] sm:$0x1]
  %v646 = vld [vmem:[%s586 + $0x42] sm:$0x1]
  %v647 = vld [vmem:[%s586 + $0x43] sm:$0x1]
  %v648 = vld [vmem:[%s586 + $0x44] sm:$0x1]
  %v649 = vld [vmem:[%s586 + $0x45] sm:$0x1]
  %v650 = vld [vmem:[%s586 + $0x46] sm:$0x1]
  %v651 = vmul.f32 %v587, 0.25
  %v652 = vmul.f32 %v588, 0.25
  %v653 = vmul.f32 %v589, 0.25
  %v654 = vmul.f32 %v590, 0.25
  %v655 = vmul.f32 %v591, 0.25
  %v656 = vmul.f32 %v592, 0.25
  %v657 = vmul.f32 %v593, 0.25
  %v658 = vmul.f32 %v594, 0.25
  %v659 = vmul.f32 %v595, 0.25
  %v660 = vmul.f32 %v596, 0.25
  %v661 = vmul.f32 %v597, 0.25
  %v662 = vmul.f32 %v598, 0.25
  %v663 = vmul.f32 %v599, 0.25
  %v664 = vmul.f32 %v600, 0.25
  %v665 = vmul.f32 %v601, 0.25
  %v666 = vmul.f32 %v602, 0.25
  %v667 = vmul.f32 %v603, 0.25
  %v668 = vmul.f32 %v604, 0.25
  %v669 = vmul.f32 %v605, 0.25
  %v670 = vmul.f32 %v606, 0.25
  %v671 = vmul.f32 %v607, 0.25
  %v672 = vmul.f32 %v608, 0.25
  %v673 = vmul.f32 %v609, 0.25
  %v674 = vmul.f32 %v610, 0.25
  %v675 = vmul.f32 %v611, 0.25
  %v676 = vmul.f32 %v612, 0.25
  %v677 = vmul.f32 %v613, 0.25
  %v678 = vmul.f32 %v614, 0.25
  %v679 = vmul.f32 %v615, 0.25
  %v680 = vmul.f32 %v616, 0.25
  %v681 = vmul.f32 %v617, 0.25
  %v682 = vmul.f32 %v618, 0.25
  %v683 = vmul.f32 %v619, 0.25
  %v684 = vmul.f32 %v620, 0.25
  %v685 = vmul.f32 %v621, 0.25
  %v686 = vmul.f32 %v622, 0.25
  %v687 = vmul.f32 %v623, 0.25
  %v688 = vmul.f32 %v624, 0.25
  %v689 = vmul.f32 %v625, 0.25
  %v690 = vmul.f32 %v626, 0.25
  %v691 = vmul.f32 %v627, 0.25
  %v692 = vmul.f32 %v628, 0.25
  %v693 = vmul.f32 %v629, 0.25
  %v694 = vmul.f32 %v630, 0.25
  %v695 = vmul.f32 %v631, 0.25
  %v696 = vmul.f32 %v632, 0.25
  %v697 = vmul.f32 %v633, 0.25
  %v698 = vmul.f32 %v634, 0.25
  %v699 = vmul.f32 %v635, 0.25
  %v700 = vmul.f32 %v636, 0.25
  %v701 = vmul.f32 %v637, 0.25
  %v702 = vmul.f32 %v638, 0.25
  %v703 = vmul.f32 %v639, 0.25
  %v704 = vmul.f32 %v640, 0.25
  %v705 = vmul.f32 %v641, 0.25
  %v706 = vmul.f32 %v642, 0.25
  %v707 = vmul.f32 %v643, 0.25
  %v708 = vmul.f32 %v644, 0.25
  %v709 = vmul.f32 %v645, 0.25
  %v710 = vmul.f32 %v646, 0.25
  %v711 = vmul.f32 %v647, 0.25
  %v712 = vmul.f32 %v648, 0.25
  %v713 = vmul.f32 %v649, 0.25
  %v714 = vmul.f32 %v650, 0.25
  %s715 = scalar_lea.vmem %s0, 243
  %v716 = vld [vmem:[%s715] sm:$0x1]
  %v717 = vld [vmem:[%s715 + $0x1] sm:$0x1]
  %v718 = vld [vmem:[%s715 + $0x2] sm:$0x1]
  %v719 = vld [vmem:[%s715 + $0x3] sm:$0x1]
  %v720 = vld [vmem:[%s715 + $0x4] sm:$0x1]
  %v721 = vld [vmem:[%s715 + $0x5] sm:$0x1]
  %v722 = vld [vmem:[%s715 + $0x6] sm:$0x1]
  %v723 = vld [vmem:[%s715 + $0x7] sm:$0x1]
  %v724 = vld [vmem:[%s715 + $0x9] sm:$0x1]
  %v725 = vld [vmem:[%s715 + $0xa] sm:$0x1]
  %v726 = vld [vmem:[%s715 + $0xb] sm:$0x1]
  %v727 = vld [vmem:[%s715 + $0xc] sm:$0x1]
  %v728 = vld [vmem:[%s715 + $0xd] sm:$0x1]
  %v729 = vld [vmem:[%s715 + $0xe] sm:$0x1]
  %v730 = vld [vmem:[%s715 + $0xf] sm:$0x1]
  %v731 = vld [vmem:[%s715 + $0x10] sm:$0x1]
  %v732 = vld [vmem:[%s715 + $0x12] sm:$0x1]
  %v733 = vld [vmem:[%s715 + $0x13] sm:$0x1]
  %v734 = vld [vmem:[%s715 + $0x14] sm:$0x1]
  %v735 = vld [vmem:[%s715 + $0x15] sm:$0x1]
  %v736 = vld [vmem:[%s715 + $0x16] sm:$0x1]
  %v737 = vld [vmem:[%s715 + $0x17] sm:$0x1]
  %v738 = vld [vmem:[%s715 + $0x18] sm:$0x1]
  %v739 = vld [vmem:[%s715 + $0x19] sm:$0x1]
  %v740 = vld [vmem:[%s715 + $0x1b] sm:$0x1]
  %v741 = vld [vmem:[%s715 + $0x1c] sm:$0x1]
  %v742 = vld [vmem:[%s715 + $0x1d] sm:$0x1]
  %v743 = vld [vmem:[%s715 + $0x1e] sm:$0x1]
  %v744 = vld [vmem:[%s715 + $0x1f] sm:$0x1]
  %v745 = vld [vmem:[%s715 + $0x20] sm:$0x1]
  %v746 = vld [vmem:[%s715 + $0x21] sm:$0x1]
  %v747 = vld [vmem:[%s715 + $0x22] sm:$0x1]
  %v748 = vld [vmem:[%s715 + $0x24] sm:$0x1]
  %v749 = vld [vmem:[%s715 + $0x25] sm:$0x1]
  %v750 = vld [vmem:[%s715 + $0x26] sm:$0x1]
  %v751 = vld [vmem:[%s715 + $0x27] sm:$0x1]
  %v752 = vld [vmem:[%s715 + $0x28] sm:$0x1]
  %v753 = vld [vmem:[%s715 + $0x29] sm:$0x1]
  %v754 = vld [vmem:[%s715 + $0x2a] sm:$0x1]
  %v755 = vld [vmem:[%s715 + $0x2b] sm:$0x1]
  %v756 = vld [vmem:[%s715 + $0x2d] sm:$0x1]
  %v757 = vld [vmem:[%s715 + $0x2e] sm:$0x1]
  %v758 = vld [vmem:[%s715 + $0x2f] sm:$0x1]
  %v759 = vld [vmem:[%s715 + $0x30] sm:$0x1]
  %v760 = vld [vmem:[%s715 + $0x31] sm:$0x1]
  %v761 = vld [vmem:[%s715 + $0x32] sm:$0x1]
  %v762 = vld [vmem:[%s715 + $0x33] sm:$0x1]
  %v763 = vld [vmem:[%s715 + $0x34] sm:$0x1]
  %v764 = vld [vmem:[%s715 + $0x36] sm:$0x1]
  %v765 = vld [vmem:[%s715 + $0x37] sm:$0x1]
  %v766 = vld [vmem:[%s715 + $0x38] sm:$0x1]
  %v767 = vld [vmem:[%s715 + $0x39] sm:$0x1]
  %v768 = vld [vmem:[%s715 + $0x3a] sm:$0x1]
  %v769 = vld [vmem:[%s715 + $0x3b] sm:$0x1]
  %v770 = vld [vmem:[%s715 + $0x3c] sm:$0x1]
  %v771 = vld [vmem:[%s715 + $0x3d] sm:$0x1]
  %v772 = vld [vmem:[%s715 + $0x3f] sm:$0x1]
  %v773 = vld [vmem:[%s715 + $0x40] sm:$0x1]
  %v774 = vld [vmem:[%s715 + $0x41] sm:$0x1]
  %v775 = vld [vmem:[%s715 + $0x42] sm:$0x1]
  %v776 = vld [vmem:[%s715 + $0x43] sm:$0x1]
  %v777 = vld [vmem:[%s715 + $0x44] sm:$0x1]
  %v778 = vld [vmem:[%s715 + $0x45] sm:$0x1]
  %v779 = vld [vmem:[%s715 + $0x46] sm:$0x1]
  %v780 = vmul.f32 %v716, 0.5
  %v781 = vmul.f32 %v717, 0.5
  %v782 = vmul.f32 %v718, 0.5
  %v783 = vmul.f32 %v719, 0.5
  %v784 = vmul.f32 %v720, 0.5
  %v785 = vmul.f32 %v721, 0.5
  %v786 = vmul.f32 %v722, 0.5
  %v787 = vmul.f32 %v723, 0.5
  %v788 = vmul.f32 %v724, 0.5
  %v789 = vmul.f32 %v725, 0.5
  %v790 = vmul.f32 %v726, 0.5
  %v791 = vmul.f32 %v727, 0.5
  %v792 = vmul.f32 %v728, 0.5
  %v793 = vmul.f32 %v729, 0.5
  %v794 = vmul.f32 %v730, 0.5
  %v795 = vmul.f32 %v731, 0.5
  %v796 = vmul.f32 %v732, 0.5
  %v797 = vmul.f32 %v733, 0.5
  %v798 = vmul.f32 %v734, 0.5
  %v799 = vmul.f32 %v735, 0.5
  %v800 = vmul.f32 %v736, 0.5
  %v801 = vmul.f32 %v737, 0.5
  %v802 = vmul.f32 %v738, 0.5
  %v803 = vmul.f32 %v739, 0.5
  %v804 = vmul.f32 %v740, 0.5
  %v805 = vmul.f32 %v741, 0.5
  %v806 = vmul.f32 %v742, 0.5
  %v807 = vmul.f32 %v743, 0.5
  %v808 = vmul.f32 %v744, 0.5
  %v809 = vmul.f32 %v745, 0.5
  %v810 = vmul.f32 %v746, 0.5
  %v811 = vmul.f32 %v747, 0.5
  %v812 = vmul.f32 %v748, 0.5
  %v813 = vmul.f32 %v749, 0.5
  %v814 = vmul.f32 %v750, 0.5
  %v815 = vmul.f32 %v751, 0.5
  %v816 = vmul.f32 %v752, 0.5
  %v817 = vmul.f32 %v753, 0.5
  %v818 = vmul.f32 %v754, 0.5
  %v819 = vmul.f32 %v755, 0.5
  %v820 = vmul.f32 %v756, 0.5
  %v821 = vmul.f32 %v757, 0.5
  %v822 = vmul.f32 %v758, 0.5
  %v823 = vmul.f32 %v759, 0.5
  %v824 = vmul.f32 %v760, 0.5
  %v825 = vmul.f32 %v761, 0.5
  %v826 = vmul.f32 %v762, 0.5
  %v827 = vmul.f32 %v763, 0.5
  %v828 = vmul.f32 %v764, 0.5
  %v829 = vmul.f32 %v765, 0.5
  %v830 = vmul.f32 %v766, 0.5
  %v831 = vmul.f32 %v767, 0.5
  %v832 = vmul.f32 %v768, 0.5
  %v833 = vmul.f32 %v769, 0.5
  %v834 = vmul.f32 %v770, 0.5
  %v835 = vmul.f32 %v771, 0.5
  %v836 = vmul.f32 %v772, 0.5
  %v837 = vmul.f32 %v773, 0.5
  %v838 = vmul.f32 %v774, 0.5
  %v839 = vmul.f32 %v775, 0.5
  %v840 = vmul.f32 %v776, 0.5
  %v841 = vmul.f32 %v777, 0.5
  %v842 = vmul.f32 %v778, 0.5
  %v843 = vmul.f32 %v779, 0.5
  %v844 = vadd.f32 %v651, %v780
  %v845 = vadd.f32 %v652, %v781
  %v846 = vadd.f32 %v653, %v782
  %v847 = vadd.f32 %v654, %v783
  %v848 = vadd.f32 %v655, %v784
  %v849 = vadd.f32 %v656, %v785
  %v850 = vadd.f32 %v657, %v786
  %v851 = vadd.f32 %v658, %v787
  %v852 = vadd.f32 %v659, %v788
  %v853 = vadd.f32 %v660, %v789
  %v854 = vadd.f32 %v661, %v790
  %v855 = vadd.f32 %v662, %v791
  %v856 = vadd.f32 %v663, %v792
  %v857 = vadd.f32 %v664, %v793
  %v858 = vadd.f32 %v665, %v794
  %v859 = vadd.f32 %v666, %v795
  %v860 = vadd.f32 %v667, %v796
  %v861 = vadd.f32 %v668, %v797
  %v862 = vadd.f32 %v669, %v798
  %v863 = vadd.f32 %v670, %v799
  %v864 = vadd.f32 %v671, %v800
  %v865 = vadd.f32 %v672, %v801
  %v866 = vadd.f32 %v673, %v802
  %v867 = vadd.f32 %v674, %v803
  %v868 = vadd.f32 %v675, %v804
  %v869 = vadd.f32 %v676, %v805
  %v870 = vadd.f32 %v677, %v806
  %v871 = vadd.f32 %v678, %v807
  %v872 = vadd.f32 %v679, %v808
  %v873 = vadd.f32 %v680, %v809
  %v874 = vadd.f32 %v681, %v810
  %v875 = vadd.f32 %v682, %v811
  %v876 = vadd.f32 %v683, %v812
  %v877 = vadd.f32 %v684, %v813
  %v878 = vadd.f32 %v685, %v814
  %v879 = vadd.f32 %v686, %v815
  %v880 = vadd.f32 %v687, %v816
  %v881 = vadd.f32 %v688, %v817
  %v882 = vadd.f32 %v689, %v818
  %v883 = vadd.f32 %v690, %v819
  %v884 = vadd.f32 %v691, %v820
  %v885 = vadd.f32 %v692, %v821
  %v886 = vadd.f32 %v693, %v822
  %v887 = vadd.f32 %v694, %v823
  %v888 = vadd.f32 %v695, %v824
  %v889 = vadd.f32 %v696, %v825
  %v890 = vadd.f32 %v697, %v826
  %v891 = vadd.f32 %v698, %v827
  %v892 = vadd.f32 %v699, %v828
  %v893 = vadd.f32 %v700, %v829
  %v894 = vadd.f32 %v701, %v830
  %v895 = vadd.f32 %v702, %v831
  %v896 = vadd.f32 %v703, %v832
  %v897 = vadd.f32 %v704, %v833
  %v898 = vadd.f32 %v705, %v834
  %v899 = vadd.f32 %v706, %v835
  %v900 = vadd.f32 %v707, %v836
  %v901 = vadd.f32 %v708, %v837
  %v902 = vadd.f32 %v709, %v838
  %v903 = vadd.f32 %v710, %v839
  %v904 = vadd.f32 %v711, %v840
  %v905 = vadd.f32 %v712, %v841
  %v906 = vadd.f32 %v713, %v842
  %v907 = vadd.f32 %v714, %v843
  %s908 = scalar_lea.vmem %s0, 163
  %v909 = vld [vmem:[%s908] sm:$0x1]
  %v910 = vld [vmem:[%s908 + $0x1] sm:$0x1]
  %v911 = vld [vmem:[%s908 + $0x2] sm:$0x1]
  %v912 = vld [vmem:[%s908 + $0x3] sm:$0x1]
  %v913 = vld [vmem:[%s908 + $0x4] sm:$0x1]
  %v914 = vld [vmem:[%s908 + $0x5] sm:$0x1]
  %v915 = vld [vmem:[%s908 + $0x6] sm:$0x1]
  %v916 = vld [vmem:[%s908 + $0x7] sm:$0x1]
  %v917 = vld [vmem:[%s908 + $0x9] sm:$0x1]
  %v918 = vld [vmem:[%s908 + $0xa] sm:$0x1]
  %v919 = vld [vmem:[%s908 + $0xb] sm:$0x1]
  %v920 = vld [vmem:[%s908 + $0xc] sm:$0x1]
  %v921 = vld [vmem:[%s908 + $0xd] sm:$0x1]
  %v922 = vld [vmem:[%s908 + $0xe] sm:$0x1]
  %v923 = vld [vmem:[%s908 + $0xf] sm:$0x1]
  %v924 = vld [vmem:[%s908 + $0x10] sm:$0x1]
  %v925 = vld [vmem:[%s908 + $0x12] sm:$0x1]
  %v926 = vld [vmem:[%s908 + $0x13] sm:$0x1]
  %v927 = vld [vmem:[%s908 + $0x14] sm:$0x1]
  %v928 = vld [vmem:[%s908 + $0x15] sm:$0x1]
  %v929 = vld [vmem:[%s908 + $0x16] sm:$0x1]
  %v930 = vld [vmem:[%s908 + $0x17] sm:$0x1]
  %v931 = vld [vmem:[%s908 + $0x18] sm:$0x1]
  %v932 = vld [vmem:[%s908 + $0x19] sm:$0x1]
  %v933 = vld [vmem:[%s908 + $0x1b] sm:$0x1]
  %v934 = vld [vmem:[%s908 + $0x1c] sm:$0x1]
  %v935 = vld [vmem:[%s908 + $0x1d] sm:$0x1]
  %v936 = vld [vmem:[%s908 + $0x1e] sm:$0x1]
  %v937 = vld [vmem:[%s908 + $0x1f] sm:$0x1]
  %v938 = vld [vmem:[%s908 + $0x20] sm:$0x1]
  %v939 = vld [vmem:[%s908 + $0x21] sm:$0x1]
  %v940 = vld [vmem:[%s908 + $0x22] sm:$0x1]
  %v941 = vld [vmem:[%s908 + $0x24] sm:$0x1]
  %v942 = vld [vmem:[%s908 + $0x25] sm:$0x1]
  %v943 = vld [vmem:[%s908 + $0x26] sm:$0x1]
  %v944 = vld [vmem:[%s908 + $0x27] sm:$0x1]
  %v945 = vld [vmem:[%s908 + $0x28] sm:$0x1]
  %v946 = vld [vmem:[%s908 + $0x29] sm:$0x1]
  %v947 = vld [vmem:[%s908 + $0x2a] sm:$0x1]
  %v948 = vld [vmem:[%s908 + $0x2b] sm:$0x1]
  %v949 = vld [vmem:[%s908 + $0x2d] sm:$0x1]
  %v950 = vld [vmem:[%s908 + $0x2e] sm:$0x1]
  %v951 = vld [vmem:[%s908 + $0x2f] sm:$0x1]
  %v952 = vld [vmem:[%s908 + $0x30] sm:$0x1]
  %v953 = vld [vmem:[%s908 + $0x31] sm:$0x1]
  %v954 = vld [vmem:[%s908 + $0x32] sm:$0x1]
  %v955 = vld [vmem:[%s908 + $0x33] sm:$0x1]
  %v956 = vld [vmem:[%s908 + $0x34] sm:$0x1]
  %v957 = vld [vmem:[%s908 + $0x36] sm:$0x1]
  %v958 = vld [vmem:[%s908 + $0x37] sm:$0x1]
  %v959 = vld [vmem:[%s908 + $0x38] sm:$0x1]
  %v960 = vld [vmem:[%s908 + $0x39] sm:$0x1]
  %v961 = vld [vmem:[%s908 + $0x3a] sm:$0x1]
  %v962 = vld [vmem:[%s908 + $0x3b] sm:$0x1]
  %v963 = vld [vmem:[%s908 + $0x3c] sm:$0x1]
  %v964 = vld [vmem:[%s908 + $0x3d] sm:$0x1]
  %v965 = vld [vmem:[%s908 + $0x3f] sm:$0x1]
  %v966 = vld [vmem:[%s908 + $0x40] sm:$0x1]
  %v967 = vld [vmem:[%s908 + $0x41] sm:$0x1]
  %v968 = vld [vmem:[%s908 + $0x42] sm:$0x1]
  %v969 = vld [vmem:[%s908 + $0x43] sm:$0x1]
  %v970 = vld [vmem:[%s908 + $0x44] sm:$0x1]
  %v971 = vld [vmem:[%s908 + $0x45] sm:$0x1]
  %v972 = vld [vmem:[%s908 + $0x46] sm:$0x1]
  %v973 = vmul.f32 %v909, 0.25
  %v974 = vmul.f32 %v910, 0.25
  %v975 = vmul.f32 %v911, 0.25
  %v976 = vmul.f32 %v912, 0.25
  %v977 = vmul.f32 %v913, 0.25
  %v978 = vmul.f32 %v914, 0.25
  %v979 = vmul.f32 %v915, 0.25
  %v980 = vmul.f32 %v916, 0.25
  %v981 = vmul.f32 %v917, 0.25
  %v982 = vmul.f32 %v918, 0.25
  %v983 = vmul.f32 %v919, 0.25
  %v984 = vmul.f32 %v920, 0.25
  %v985 = vmul.f32 %v921, 0.25
  %v986 = vmul.f32 %v922, 0.25
  %v987 = vmul.f32 %v923, 0.25
  %v988 = vmul.f32 %v924, 0.25
  %v989 = vmul.f32 %v925, 0.25
  %v990 = vmul.f32 %v926, 0.25
  %v991 = vmul.f32 %v927, 0.25
  %v992 = vmul.f32 %v928, 0.25
  %v993 = vmul.f32 %v929, 0.25
  %v994 = vmul.f32 %v930, 0.25
  %v995 = vmul.f32 %v931, 0.25
  %v996 = vmul.f32 %v932, 0.25
  %v997 = vmul.f32 %v933, 0.25
  %v998 = vmul.f32 %v934, 0.25
  %v999 = vmul.f32 %v935, 0.25
  %v1000 = vmul.f32 %v936, 0.25
  %v1001 = vmul.f32 %v937, 0.25
  %v1002 = vmul.f32 %v938, 0.25
  %v1003 = vmul.f32 %v939, 0.25
  %v1004 = vmul.f32 %v940, 0.25
  %v1005 = vmul.f32 %v941, 0.25
  %v1006 = vmul.f32 %v942, 0.25
  %v1007 = vmul.f32 %v943, 0.25
  %v1008 = vmul.f32 %v944, 0.25
  %v1009 = vmul.f32 %v945, 0.25
  %v1010 = vmul.f32 %v946, 0.25
  %v1011 = vmul.f32 %v947, 0.25
  %v1012 = vmul.f32 %v948, 0.25
  %v1013 = vmul.f32 %v949, 0.25
  %v1014 = vmul.f32 %v950, 0.25
  %v1015 = vmul.f32 %v951, 0.25
  %v1016 = vmul.f32 %v952, 0.25
  %v1017 = vmul.f32 %v953, 0.25
  %v1018 = vmul.f32 %v954, 0.25
  %v1019 = vmul.f32 %v955, 0.25
  %v1020 = vmul.f32 %v956, 0.25
  %v1021 = vmul.f32 %v957, 0.25
  %v1022 = vmul.f32 %v958, 0.25
  %v1023 = vmul.f32 %v959, 0.25
  %v1024 = vmul.f32 %v960, 0.25
  %v1025 = vmul.f32 %v961, 0.25
  %v1026 = vmul.f32 %v962, 0.25
  %v1027 = vmul.f32 %v963, 0.25
  %v1028 = vmul.f32 %v964, 0.25
  %v1029 = vmul.f32 %v965, 0.25
  %v1030 = vmul.f32 %v966, 0.25
  %v1031 = vmul.f32 %v967, 0.25
  %v1032 = vmul.f32 %v968, 0.25
  %v1033 = vmul.f32 %v969, 0.25
  %v1034 = vmul.f32 %v970, 0.25
  %v1035 = vmul.f32 %v971, 0.25
  %v1036 = vmul.f32 %v972, 0.25
  %v1037 = vadd.f32 %v844, %v973
  %v1038 = vadd.f32 %v845, %v974
  %v1039 = vadd.f32 %v846, %v975
  %v1040 = vadd.f32 %v847, %v976
  %v1041 = vadd.f32 %v848, %v977
  %v1042 = vadd.f32 %v849, %v978
  %v1043 = vadd.f32 %v850, %v979
  %v1044 = vadd.f32 %v851, %v980
  %v1045 = vadd.f32 %v852, %v981
  %v1046 = vadd.f32 %v853, %v982
  %v1047 = vadd.f32 %v854, %v983
  %v1048 = vadd.f32 %v855, %v984
  %v1049 = vadd.f32 %v856, %v985
  %v1050 = vadd.f32 %v857, %v986
  %v1051 = vadd.f32 %v858, %v987
  %v1052 = vadd.f32 %v859, %v988
  %v1053 = vadd.f32 %v860, %v989
  %v1054 = vadd.f32 %v861, %v990
  %v1055 = vadd.f32 %v862, %v991
  %v1056 = vadd.f32 %v863, %v992
  %v1057 = vadd.f32 %v864, %v993
  %v1058 = vadd.f32 %v865, %v994
  %v1059 = vadd.f32 %v866, %v995
  %v1060 = vadd.f32 %v867, %v996
  %v1061 = vadd.f32 %v868, %v997
  %v1062 = vadd.f32 %v869, %v998
  %v1063 = vadd.f32 %v870, %v999
  %v1064 = vadd.f32 %v871, %v1000
  %v1065 = vadd.f32 %v872, %v1001
  %v1066 = vadd.f32 %v873, %v1002
  %v1067 = vadd.f32 %v874, %v1003
  %v1068 = vadd.f32 %v875, %v1004
  %v1069 = vadd.f32 %v876, %v1005
  %v1070 = vadd.f32 %v877, %v1006
  %v1071 = vadd.f32 %v878, %v1007
  %v1072 = vadd.f32 %v879, %v1008
  %v1073 = vadd.f32 %v880, %v1009
  %v1074 = vadd.f32 %v881, %v1010
  %v1075 = vadd.f32 %v882, %v1011
  %v1076 = vadd.f32 %v883, %v1012
  %v1077 = vadd.f32 %v884, %v1013
  %v1078 = vadd.f32 %v885, %v1014
  %v1079 = vadd.f32 %v886, %v1015
  %v1080 = vadd.f32 %v887, %v1016
  %v1081 = vadd.f32 %v888, %v1017
  %v1082 = vadd.f32 %v889, %v1018
  %v1083 = vadd.f32 %v890, %v1019
  %v1084 = vadd.f32 %v891, %v1020
  %v1085 = vadd.f32 %v892, %v1021
  %v1086 = vadd.f32 %v893, %v1022
  %v1087 = vadd.f32 %v894, %v1023
  %v1088 = vadd.f32 %v895, %v1024
  %v1089 = vadd.f32 %v896, %v1025
  %v1090 = vadd.f32 %v897, %v1026
  %v1091 = vadd.f32 %v898, %v1027
  %v1092 = vadd.f32 %v899, %v1028
  %v1093 = vadd.f32 %v900, %v1029
  %v1094 = vadd.f32 %v901, %v1030
  %v1095 = vadd.f32 %v902, %v1031
  %v1096 = vadd.f32 %v903, %v1032
  %v1097 = vadd.f32 %v904, %v1033
  %v1098 = vadd.f32 %v905, %v1034
  %v1099 = vadd.f32 %v906, %v1035
  %v1100 = vadd.f32 %v907, %v1036
  %v1101 = vmul.f32 %v514, 0.25
  %v1102 = vmul.f32 %v515, 0.25
  %v1103 = vmul.f32 %v516, 0.25
  %v1104 = vmul.f32 %v517, 0.25
  %v1105 = vmul.f32 %v518, 0.25
  %v1106 = vmul.f32 %v519, 0.25
  %v1107 = vmul.f32 %v520, 0.25
  %v1108 = vmul.f32 %v521, 0.25
  %v1109 = vmul.f32 %v522, 0.25
  %v1110 = vmul.f32 %v523, 0.25
  %v1111 = vmul.f32 %v524, 0.25
  %v1112 = vmul.f32 %v525, 0.25
  %v1113 = vmul.f32 %v526, 0.25
  %v1114 = vmul.f32 %v527, 0.25
  %v1115 = vmul.f32 %v528, 0.25
  %v1116 = vmul.f32 %v529, 0.25
  %v1117 = vmul.f32 %v530, 0.25
  %v1118 = vmul.f32 %v531, 0.25
  %v1119 = vmul.f32 %v532, 0.25
  %v1120 = vmul.f32 %v533, 0.25
  %v1121 = vmul.f32 %v534, 0.25
  %v1122 = vmul.f32 %v535, 0.25
  %v1123 = vmul.f32 %v536, 0.25
  %v1124 = vmul.f32 %v537, 0.25
  %v1125 = vmul.f32 %v538, 0.25
  %v1126 = vmul.f32 %v539, 0.25
  %v1127 = vmul.f32 %v540, 0.25
  %v1128 = vmul.f32 %v541, 0.25
  %v1129 = vmul.f32 %v542, 0.25
  %v1130 = vmul.f32 %v543, 0.25
  %v1131 = vmul.f32 %v544, 0.25
  %v1132 = vmul.f32 %v545, 0.25
  %v1133 = vmul.f32 %v546, 0.25
  %v1134 = vmul.f32 %v547, 0.25
  %v1135 = vmul.f32 %v548, 0.25
  %v1136 = vmul.f32 %v549, 0.25
  %v1137 = vmul.f32 %v550, 0.25
  %v1138 = vmul.f32 %v551, 0.25
  %v1139 = vmul.f32 %v552, 0.25
  %v1140 = vmul.f32 %v553, 0.25
  %v1141 = vmul.f32 %v554, 0.25
  %v1142 = vmul.f32 %v555, 0.25
  %v1143 = vmul.f32 %v556, 0.25
  %v1144 = vmul.f32 %v557, 0.25
  %v1145 = vmul.f32 %v558, 0.25
  %v1146 = vmul.f32 %v559, 0.25
  %v1147 = vmul.f32 %v560, 0.25
  %v1148 = vmul.f32 %v561, 0.25
  %v1149 = vmul.f32 %v562, 0.25
  %v1150 = vmul.f32 %v563, 0.25
  %v1151 = vmul.f32 %v564, 0.25
  %v1152 = vmul.f32 %v565, 0.25
  %v1153 = vmul.f32 %v566, 0.25
  %v1154 = vmul.f32 %v567, 0.25
  %v1155 = vmul.f32 %v568, 0.25
  %v1156 = vmul.f32 %v569, 0.25
  %v1157 = vmul.f32 %v570, 0.25
  %v1158 = vmul.f32 %v571, 0.25
  %v1159 = vmul.f32 %v572, 0.25
  %v1160 = vmul.f32 %v573, 0.25
  %v1161 = vmul.f32 %v574, 0.25
  %v1162 = vmul.f32 %v575, 0.25
  %v1163 = vmul.f32 %v576, 0.25
  %v1164 = vmul.f32 %v577, 0.25
  %v1165 = vmul.f32 %v1037, 0.5
  %v1166 = vmul.f32 %v1038, 0.5
  %v1167 = vmul.f32 %v1039, 0.5
  %v1168 = vmul.f32 %v1040, 0.5
  %v1169 = vmul.f32 %v1041, 0.5
  %v1170 = vmul.f32 %v1042, 0.5
  %v1171 = vmul.f32 %v1043, 0.5
  %v1172 = vmul.f32 %v1044, 0.5
  %v1173 = vmul.f32 %v1045, 0.5
  %v1174 = vmul.f32 %v1046, 0.5
  %v1175 = vmul.f32 %v1047, 0.5
  %v1176 = vmul.f32 %v1048, 0.5
  %v1177 = vmul.f32 %v1049, 0.5
  %v1178 = vmul.f32 %v1050, 0.5
  %v1179 = vmul.f32 %v1051, 0.5
  %v1180 = vmul.f32 %v1052, 0.5
  %v1181 = vmul.f32 %v1053, 0.5
  %v1182 = vmul.f32 %v1054, 0.5
  %v1183 = vmul.f32 %v1055, 0.5
  %v1184 = vmul.f32 %v1056, 0.5
  %v1185 = vmul.f32 %v1057, 0.5
  %v1186 = vmul.f32 %v1058, 0.5
  %v1187 = vmul.f32 %v1059, 0.5
  %v1188 = vmul.f32 %v1060, 0.5
  %v1189 = vmul.f32 %v1061, 0.5
  %v1190 = vmul.f32 %v1062, 0.5
  %v1191 = vmul.f32 %v1063, 0.5
  %v1192 = vmul.f32 %v1064, 0.5
  %v1193 = vmul.f32 %v1065, 0.5
  %v1194 = vmul.f32 %v1066, 0.5
  %v1195 = vmul.f32 %v1067, 0.5
  %v1196 = vmul.f32 %v1068, 0.5
  %v1197 = vmul.f32 %v1069, 0.5
  %v1198 = vmul.f32 %v1070, 0.5
  %v1199 = vmul.f32 %v1071, 0.5
  %v1200 = vmul.f32 %v1072, 0.5
  %v1201 = vmul.f32 %v1073, 0.5
  %v1202 = vmul.f32 %v1074, 0.5
  %v1203 = vmul.f32 %v1075, 0.5
  %v1204 = vmul.f32 %v1076, 0.5
  %v1205 = vmul.f32 %v1077, 0.5
  %v1206 = vmul.f32 %v1078, 0.5
  %v1207 = vmul.f32 %v1079, 0.5
  %v1208 = vmul.f32 %v1080, 0.5
  %v1209 = vmul.f32 %v1081, 0.5
  %v1210 = vmul.f32 %v1082, 0.5
  %v1211 = vmul.f32 %v1083, 0.5
  %v1212 = vmul.f32 %v1084, 0.5
  %v1213 = vmul.f32 %v1085, 0.5
  %v1214 = vmul.f32 %v1086, 0.5
  %v1215 = vmul.f32 %v1087, 0.5
  %v1216 = vmul.f32 %v1088, 0.5
  %v1217 = vmul.f32 %v1089, 0.5
  %v1218 = vmul.f32 %v1090, 0.5
  %v1219 = vmul.f32 %v1091, 0.5
  %v1220 = vmul.f32 %v1092, 0.5
  %v1221 = vmul.f32 %v1093, 0.5
  %v1222 = vmul.f32 %v1094, 0.5
  %v1223 = vmul.f32 %v1095, 0.5
  %v1224 = vmul.f32 %v1096, 0.5
  %v1225 = vmul.f32 %v1097, 0.5
  %v1226 = vmul.f32 %v1098, 0.5
  %v1227 = vmul.f32 %v1099, 0.5
  %v1228 = vmul.f32 %v1100, 0.5
  %v1229 = vadd.f32 %v1101, %v1165
  %v1230 = vadd.f32 %v1102, %v1166
  %v1231 = vadd.f32 %v1103, %v1167
  %v1232 = vadd.f32 %v1104, %v1168
  %v1233 = vadd.f32 %v1105, %v1169
  %v1234 = vadd.f32 %v1106, %v1170
  %v1235 = vadd.f32 %v1107, %v1171
  %v1236 = vadd.f32 %v1108, %v1172
  %v1237 = vadd.f32 %v1109, %v1173
  %v1238 = vadd.f32 %v1110, %v1174
  %v1239 = vadd.f32 %v1111, %v1175
  %v1240 = vadd.f32 %v1112, %v1176
  %v1241 = vadd.f32 %v1113, %v1177
  %v1242 = vadd.f32 %v1114, %v1178
  %v1243 = vadd.f32 %v1115, %v1179
  %v1244 = vadd.f32 %v1116, %v1180
  %v1245 = vadd.f32 %v1117, %v1181
  %v1246 = vadd.f32 %v1118, %v1182
  %v1247 = vadd.f32 %v1119, %v1183
  %v1248 = vadd.f32 %v1120, %v1184
  %v1249 = vadd.f32 %v1121, %v1185
  %v1250 = vadd.f32 %v1122, %v1186
  %v1251 = vadd.f32 %v1123, %v1187
  %v1252 = vadd.f32 %v1124, %v1188
  %v1253 = vadd.f32 %v1125, %v1189
  %v1254 = vadd.f32 %v1126, %v1190
  %v1255 = vadd.f32 %v1127, %v1191
  %v1256 = vadd.f32 %v1128, %v1192
  %v1257 = vadd.f32 %v1129, %v1193
  %v1258 = vadd.f32 %v1130, %v1194
  %v1259 = vadd.f32 %v1131, %v1195
  %v1260 = vadd.f32 %v1132, %v1196
  %v1261 = vadd.f32 %v1133, %v1197
  %v1262 = vadd.f32 %v1134, %v1198
  %v1263 = vadd.f32 %v1135, %v1199
  %v1264 = vadd.f32 %v1136, %v1200
  %v1265 = vadd.f32 %v1137, %v1201
  %v1266 = vadd.f32 %v1138, %v1202
  %v1267 = vadd.f32 %v1139, %v1203
  %v1268 = vadd.f32 %v1140, %v1204
  %v1269 = vadd.f32 %v1141, %v1205
  %v1270 = vadd.f32 %v1142, %v1206
  %v1271 = vadd.f32 %v1143, %v1207
  %v1272 = vadd.f32 %v1144, %v1208
  %v1273 = vadd.f32 %v1145, %v1209
  %v1274 = vadd.f32 %v1146, %v1210
  %v1275 = vadd.f32 %v1147, %v1211
  %v1276 = vadd.f32 %v1148, %v1212
  %v1277 = vadd.f32 %v1149, %v1213
  %v1278 = vadd.f32 %v1150, %v1214
  %v1279 = vadd.f32 %v1151, %v1215
  %v1280 = vadd.f32 %v1152, %v1216
  %v1281 = vadd.f32 %v1153, %v1217
  %v1282 = vadd.f32 %v1154, %v1218
  %v1283 = vadd.f32 %v1155, %v1219
  %v1284 = vadd.f32 %v1156, %v1220
  %v1285 = vadd.f32 %v1157, %v1221
  %v1286 = vadd.f32 %v1158, %v1222
  %v1287 = vadd.f32 %v1159, %v1223
  %v1288 = vadd.f32 %v1160, %v1224
  %v1289 = vadd.f32 %v1161, %v1225
  %v1290 = vadd.f32 %v1162, %v1226
  %v1291 = vadd.f32 %v1163, %v1227
  %v1292 = vadd.f32 %v1164, %v1228
  %v1293 = vmul.f32 %v578, 0.25
  %v1294 = vmul.f32 %v579, 0.25
  %v1295 = vmul.f32 %v580, 0.25
  %v1296 = vmul.f32 %v581, 0.25
  %v1297 = vmul.f32 %v582, 0.25
  %v1298 = vmul.f32 %v583, 0.25
  %v1299 = vmul.f32 %v584, 0.25
  %v1300 = vmul.f32 %v585, 0.25
  %v1301 = vadd.f32 %v1229, %v1109
  %v1302 = vadd.f32 %v1230, %v1110
  %v1303 = vadd.f32 %v1231, %v1111
  %v1304 = vadd.f32 %v1232, %v1112
  %v1305 = vadd.f32 %v1233, %v1113
  %v1306 = vadd.f32 %v1234, %v1114
  %v1307 = vadd.f32 %v1235, %v1115
  %v1308 = vadd.f32 %v1236, %v1116
  %v1309 = vadd.f32 %v1237, %v1117
  %v1310 = vadd.f32 %v1238, %v1118
  %v1311 = vadd.f32 %v1239, %v1119
  %v1312 = vadd.f32 %v1240, %v1120
  %v1313 = vadd.f32 %v1241, %v1121
  %v1314 = vadd.f32 %v1242, %v1122
  %v1315 = vadd.f32 %v1243, %v1123
  %v1316 = vadd.f32 %v1244, %v1124
  %v1317 = vadd.f32 %v1245, %v1125
  %v1318 = vadd.f32 %v1246, %v1126
  %v1319 = vadd.f32 %v1247, %v1127
  %v1320 = vadd.f32 %v1248, %v1128
  %v1321 = vadd.f32 %v1249, %v1129
  %v1322 = vadd.f32 %v1250, %v1130
  %v1323 = vadd.f32 %v1251, %v1131
  %v1324 = vadd.f32 %v1252, %v1132
  %v1325 = vadd.f32 %v1253, %v1133
  %v1326 = vadd.f32 %v1254, %v1134
  %v1327 = vadd.f32 %v1255, %v1135
  %v1328 = vadd.f32 %v1256, %v1136
  %v1329 = vadd.f32 %v1257, %v1137
  %v1330 = vadd.f32 %v1258, %v1138
  %v1331 = vadd.f32 %v1259, %v1139
  %v1332 = vadd.f32 %v1260, %v1140
  %v1333 = vadd.f32 %v1261, %v1141
  %v1334 = vadd.f32 %v1262, %v1142
  %v1335 = vadd.f32 %v1263, %v1143
  %v1336 = vadd.f32 %v1264, %v1144
  %v1337 = vadd.f32 %v1265, %v1145
  %v1338 = vadd.f32 %v1266, %v1146
  %v1339 = vadd.f32 %v1267, %v1147
  %v1340 = vadd.f32 %v1268, %v1148
  %v1341 = vadd.f32 %v1269, %v1149
  %v1342 = vadd.f32 %v1270, %v1150
  %v1343 = vadd.f32 %v1271, %v1151
  %v1344 = vadd.f32 %v1272, %v1152
  %v1345 = vadd.f32 %v1273, %v1153
  %v1346 = vadd.f32 %v1274, %v1154
  %v1347 = vadd.f32 %v1275, %v1155
  %v1348 = vadd.f32 %v1276, %v1156
  %v1349 = vadd.f32 %v1277, %v1157
  %v1350 = vadd.f32 %v1278, %v1158
  %v1351 = vadd.f32 %v1279, %v1159
  %v1352 = vadd.f32 %v1280, %v1160
  %v1353 = vadd.f32 %v1281, %v1161
  %v1354 = vadd.f32 %v1282, %v1162
  %v1355 = vadd.f32 %v1283, %v1163
  %v1356 = vadd.f32 %v1284, %v1164
  %v1357 = vadd.f32 %v1285, %v1293
  %v1358 = vadd.f32 %v1286, %v1294
  %v1359 = vadd.f32 %v1287, %v1295
  %v1360 = vadd.f32 %v1288, %v1296
  %v1361 = vadd.f32 %v1289, %v1297
  %v1362 = vadd.f32 %v1290, %v1298
  %v1363 = vadd.f32 %v1291, %v1299
  %v1364 = vadd.f32 %v1292, %v1300
  %1365 = vst [vmem:[%s1] sm:$0x1] %v1301
  %1366 = vst [vmem:[%s1 + $0x1] sm:$0x1] %v1302
  %1367 = vst [vmem:[%s1 + $0x2] sm:$0x1] %v1303
  %1368 = vst [vmem:[%s1 + $0x3] sm:$0x1] %v1304
  %1369 = vst [vmem:[%s1 + $0x4] sm:$0x1] %v1305
  %1370 = vst [vmem:[%s1 + $0x5] sm:$0x1] %v1306
  %1371 = vst [vmem:[%s1 + $0x6] sm:$0x1] %v1307
  %1372 = vst [vmem:[%s1 + $0x7] sm:$0x1] %v1308
  %1373 = vst [vmem:[%s1 + $0x8] sm:$0x1] %v1309
  %1374 = vst [vmem:[%s1 + $0x9] sm:$0x1] %v1310
  %1375 = vst [vmem:[%s1 + $0xa] sm:$0x1] %v1311
  %1376 = vst [vmem:[%s1 + $0xb] sm:$0x1] %v1312
  %1377 = vst [vmem:[%s1 + $0xc] sm:$0x1] %v1313
  %1378 = vst [vmem:[%s1 + $0xd] sm:$0x1] %v1314
  %1379 = vst [vmem:[%s1 + $0xe] sm:$0x1] %v1315
  %1380 = vst [vmem:[%s1 + $0xf] sm:$0x1] %v1316
  %1381 = vst [vmem:[%s1 + $0x10] sm:$0x1] %v1317
  %1382 = vst [vmem:[%s1 + $0x11] sm:$0x1] %v1318
  %1383 = vst [vmem:[%s1 + $0x12] sm:$0x1] %v1319
  %1384 = vst [vmem:[%s1 + $0x13] sm:$0x1] %v1320
  %1385 = vst [vmem:[%s1 + $0x14] sm:$0x1] %v1321
  %1386 = vst [vmem:[%s1 + $0x15] sm:$0x1] %v1322
  %1387 = vst [vmem:[%s1 + $0x16] sm:$0x1] %v1323
  %1388 = vst [vmem:[%s1 + $0x17] sm:$0x1] %v1324
  %1389 = vst [vmem:[%s1 + $0x18] sm:$0x1] %v1325
  %1390 = vst [vmem:[%s1 + $0x19] sm:$0x1] %v1326
  %1391 = vst [vmem:[%s1 + $0x1a] sm:$0x1] %v1327
  %1392 = vst [vmem:[%s1 + $0x1b] sm:$0x1] %v1328
  %1393 = vst [vmem:[%s1 + $0x1c] sm:$0x1] %v1329
  %1394 = vst [vmem:[%s1 + $0x1d] sm:$0x1] %v1330
  %1395 = vst [vmem:[%s1 + $0x1e] sm:$0x1] %v1331
  %1396 = vst [vmem:[%s1 + $0x1f] sm:$0x1] %v1332
  %1397 = vst [vmem:[%s1 + $0x20] sm:$0x1] %v1333
  %1398 = vst [vmem:[%s1 + $0x21] sm:$0x1] %v1334
  %1399 = vst [vmem:[%s1 + $0x22] sm:$0x1] %v1335
  %1400 = vst [vmem:[%s1 + $0x23] sm:$0x1] %v1336
  %1401 = vst [vmem:[%s1 + $0x24] sm:$0x1] %v1337
  %1402 = vst [vmem:[%s1 + $0x25] sm:$0x1] %v1338
  %1403 = vst [vmem:[%s1 + $0x26] sm:$0x1] %v1339
  %1404 = vst [vmem:[%s1 + $0x27] sm:$0x1] %v1340
  %1405 = vst [vmem:[%s1 + $0x28] sm:$0x1] %v1341
  %1406 = vst [vmem:[%s1 + $0x29] sm:$0x1] %v1342
  %1407 = vst [vmem:[%s1 + $0x2a] sm:$0x1] %v1343
  %1408 = vst [vmem:[%s1 + $0x2b] sm:$0x1] %v1344
  %1409 = vst [vmem:[%s1 + $0x2c] sm:$0x1] %v1345
  %1410 = vst [vmem:[%s1 + $0x2d] sm:$0x1] %v1346
  %1411 = vst [vmem:[%s1 + $0x2e] sm:$0x1] %v1347
  %1412 = vst [vmem:[%s1 + $0x2f] sm:$0x1] %v1348
  %1413 = vst [vmem:[%s1 + $0x30] sm:$0x1] %v1349
  %1414 = vst [vmem:[%s1 + $0x31] sm:$0x1] %v1350
  %1415 = vst [vmem:[%s1 + $0x32] sm:$0x1] %v1351
  %1416 = vst [vmem:[%s1 + $0x33] sm:$0x1] %v1352
  %1417 = vst [vmem:[%s1 + $0x34] sm:$0x1] %v1353
  %1418 = vst [vmem:[%s1 + $0x35] sm:$0x1] %v1354
  %1419 = vst [vmem:[%s1 + $0x36] sm:$0x1] %v1355
  %1420 = vst [vmem:[%s1 + $0x37] sm:$0x1] %v1356
  %1421 = vst [vmem:[%s1 + $0x38] sm:$0x1] %v1357
  %1422 = vst [vmem:[%s1 + $0x39] sm:$0x1] %v1358
  %1423 = vst [vmem:[%s1 + $0x3a] sm:$0x1] %v1359
  %1424 = vst [vmem:[%s1 + $0x3b] sm:$0x1] %v1360
  %1425 = vst [vmem:[%s1 + $0x3c] sm:$0x1] %v1361
  %1426 = vst [vmem:[%s1 + $0x3d] sm:$0x1] %v1362
  %1427 = vst [vmem:[%s1 + $0x3e] sm:$0x1] %v1363
  %1428 = vst [vmem:[%s1 + $0x3f] sm:$0x1] %v1364
  // Predicated region
  $region6: #{blurpool2d.1} parent=0 // pred_check
    _
  $region7: #{blurpool2d.1} parent=0 // pred_check_branch
    %1430 = sbr.rel (0) target = $region9
  $region8: #{blurpool2d.1} parent=0 // pred_region
    _
  $region9: #{blurpool2d.1} parent=0 // pred_fallthru
    _
  // Predicated region
  $region10: #{blurpool2d.1} parent=0 // pred_check
    _
  $region11: #{blurpool2d.1} parent=0 // pred_check_branch
    %1432 = sbr.rel (0) target = $region13
  $region12: #{blurpool2d.1} parent=0 // pred_region
    _
  $region13: #{blurpool2d.1} parent=0 // pred_fallthru
    _

</llo_original>
